<compile_context>
chip_gen: v6e
topology: v6e:2x2x1
jax: 0.10.0
libtpu: 0.0.40
codegen_flags: <defaults>
</compile_context>

<pallas_src>
import functools

import jax
import jax.numpy as jnp
from jax.experimental import pallas as pl
from jax.experimental.pallas import tpu as pltpu

BN_EPS = 1e-5
# TODO(synk): torch.norm has no epsilon; this 1e-12 guard only avoids inf/NaN
#             for an exactly-zero sample row and is otherwise negligible.
NORM_EPS = 1e-12
LANE = 128


def _round_up(x, m):
    return ((x + m - 1) // m) * m


def _pick_spatial_tiling(hw, max_tile):
    """Return (pt, hw_padded, n_chunks): pt multiple of 128, hw_padded = n_chunks*pt."""
    max_tile = max(LANE, (max_tile // LANE) * LANE)
    if hw <= max_tile:
        pt = _round_up(hw, LANE)
        return pt, pt, 1
    pt = max_tile
    hw_padded = _round_up(hw, pt)
    return pt, hw_padded, hw_padded // pt


def _batchnorm(h, gamma, beta):
    # BatchNorm1d with batch statistics, biased variance, eps=1e-5.
    mean = jnp.mean(h, axis=0, keepdims=True)
    var = jnp.mean(jnp.square(h - mean), axis=0, keepdims=True)
    return gamma * (h - mean) * jax.lax.rsqrt(var + BN_EPS) + beta


def _make_fused_kernel(Lp, pt, n_chunks, inv_hw):
    n_lane_groups = pt // LANE

    def kernel(x_ref, convw_ref, convb_ref, corr_ref, wml_ref, w2_ref, vec_ref,
               noise_ref, mu_ref, sigma_ref, samples_ref, acc_ref):
        step = pl.program_id(0)

        # ---- init the pooled-partial accumulator on the first spatial chunk ----
        @pl.when(step == 0)
        def _init():
            acc_ref[...] = jnp.zeros_like(acc_ref)

        # ---- backbone: one batched 1x1-conv contraction per chunk ----
        # x block (B, C, pt) bf16 x conv weight (B, F, C) bf16 -> (B, F, pt) f32.
        # TODO(synk): for large B, bound live intermediates with a lax.fori_loop
        #             over batch or a second grid axis.
        h = jnp.einsum("bfc,bcp->bfp", convw_ref[...], x_ref[...],
                       preferred_element_type=jnp.float32)
        h = jnp.maximum(h + convb_ref[...], 0.0)           # bias is (1, F, 1)

        # Lane-aligned fold of the spatial axis into a (B, F, 128) partial:
        # pure VPU adds in the hot loop; the single cross-lane (XLU) reduce is
        # deferred to the epilogue.  One full-slab accumulator RMW per chunk.
        part = h[..., 0:LANE]
        for k in range(1, n_lane_groups):
            part = part + h[..., k * LANE:(k + 1) * LANE]
        acc_ref[...] += part

        # ---- heads epilogue on the last chunk (whole batch resident) ----
        @pl.when(step == n_chunks - 1)
        def _heads():
            # Global average pool: one cross-lane reduce + exact correction for
            # the zero-padded spatial columns (each contributed ReLU(bias)).
            feat = jnp.sum(acc_ref[...], axis=2) * inv_hw - corr_ref[...]   # (B, F)

            V = vec_ref[...]                          # (9, Lp) packed vectors
            bmu, gmu, betamu = V[0:1], V[1:2], V[2:3]
            b1, g1, beta1 = V[3:4], V[4:5], V[5:6]
            b2, g2, beta2 = V[6:7], V[7:8], V[8:9]

            # fc_mu and fc_log_var[0] share one (F, 2*Lp) matmul.
            h_cat = jnp.dot(feat, wml_ref[...],
                            preferred_element_type=jnp.float32)     # (B, 2*Lp)

            mu = _batchnorm(h_cat[:, :Lp] + bmu, gmu, betamu)               # (B, Lp)
            h1 = jnp.maximum(_batchnorm(h_cat[:, Lp:] + b1, g1, beta1), 0.0)
            h2 = jnp.dot(h1, w2_ref[...],
                         preferred_element_type=jnp.float32) + b2
            log_var = _batchnorm(h2, g2, beta2)                             # (B, Lp)
            sigma = jnp.exp(0.5 * log_var)

            noise = noise_ref[...]                                          # (B, N, Lp)
            samples = mu[:, None, :] + noise * sigma[:, None, :]            # (B, N, Lp)
            inv_norm = jax.lax.rsqrt(
                jnp.sum(samples * samples, axis=2, keepdims=True) + NORM_EPS)
            samples = samples * inv_norm

            mu_ref[...] = mu
            sigma_ref[...] = sigma
            samples_ref[...] = samples

    return kernel


@functools.partial(jax.jit, static_argnames=("max_spatial_tile",))
def uncertainty_module_forward(x_nchw, params, noise, *, max_spatial_tile=4096):
    """x_nchw: (B, C, H, W) f32; params: 'natural' layout dict; noise: (B, N, L) f32."""
    B, C, H, W = x_nchw.shape
    hw = H * W
    F = params["conv_w"].shape[1]
    L = params["wmu"].shape[1]
    N = noise.shape[1]
    Lp = _round_up(L, LANE)
    pad_l = Lp - L

    if B < 2:
        raise ValueError("BatchNorm with batch statistics requires batch size > 1")

    pt, hw_padded, n_chunks = _pick_spatial_tiling(hw, max_spatial_tile)
    pad_p = hw_padded - hw
    inv_hw = 1.0 / float(hw)

    # NCHW -> (B, C, H*W): free reshape; bf16 feed halves the dominant HBM
    # stream (f32 accumulation stays on the MXU).
    # TODO(synk): ideally the upstream producer emits bf16 directly so this
    #             cast is not a separate HBM pass.
    x = x_nchw.reshape(B, C, hw).astype(jnp.bfloat16)
    if pad_p:
        x = jnp.pad(x, ((0, 0), (0, 0), (0, pad_p)))

    # ---- one-time tiny parameter packing / lane padding (zero-pad is exact) ----
    def pad_last(v):
        return jnp.pad(v, [(0, 0)] * (v.ndim - 1) + [(0, pad_l)])

    conv_w_b = jnp.broadcast_to(
        params["conv_w"].T[None].astype(jnp.bfloat16), (B, F, C))   # (B, F, C)
    conv_b = params["conv_b"].reshape(1, F, 1)                      # (1, F, 1)
    # Exact pooled-sum correction for the zero-padded spatial columns.
    corr = ((float(pad_p) * inv_hw)
            * jnp.maximum(params["conv_b"], 0.0)).reshape(1, F)     # (1, F)
    wml = jnp.concatenate([pad_last(params["wmu"]),
                           pad_last(params["w1"])], axis=1)         # (F, 2*Lp)
    w2 = jnp.pad(params["w2"], ((0, pad_l), (0, pad_l)))            # (Lp, Lp)
    vecs = jnp.stack([pad_last(params[k]) for k in
                      ("bmu", "gmu", "betamu",
                       "b1", "g1", "beta1",
                       "b2", "g2", "beta2")], axis=0)               # (9, Lp)
    noise_p = jnp.pad(noise, ((0, 0), (0, 0), (0, pad_l)))          # (B, N, Lp)

    kernel = _make_fused_kernel(Lp, pt, n_chunks, inv_hw)

    # Explicit VMEM budget for the chosen tile (v5e scoped default is 16 MiB;
    # cap well under v7x's 64 MiB physical VMEM).
    x_block_b = B * C * pt * 2                      # bf16, double-buffered below
    invar_b = (conv_w_b.size * 2 + (conv_b.size + corr.size + wml.size
                                    + w2.size + vecs.size + noise_p.size) * 4)
    out_b = (2 * B * Lp + B * N * Lp) * 4
    scratch_b = B * F * LANE * 4
    h_b = B * F * pt * 4
    vmem_limit = int(min(48 * 1024 * 1024,
                         max(16 * 1024 * 1024,
                             2 * (x_block_b + invar_b + out_b)
                             + scratch_b + h_b + (8 << 20))))

    grid_spec = pltpu.PrefetchScalarGridSpec(
        num_scalar_prefetch=0,
        grid=(n_chunks,),
        in_specs=[
            pl.BlockSpec((B, C, pt), lambda p: (0, 0, p)),      # x spatial chunk (bf16)
            pl.BlockSpec((B, F, C), lambda p: (0, 0, 0)),       # conv weight (batched)
            pl.BlockSpec((1, F, 1), lambda p: (0, 0, 0)),       # conv bias
            pl.BlockSpec((1, F), lambda p: (0, 0)),             # spatial-pad correction
            pl.BlockSpec((F, 2 * Lp), lambda p: (0, 0)),        # [wmu | w1]
            pl.BlockSpec((Lp, Lp), lambda p: (0, 0)),           # w2
            pl.BlockSpec((9, Lp), lambda p: (0, 0)),            # packed BN/bias vectors
            pl.BlockSpec((B, N, Lp), lambda p: (0, 0, 0)),      # noise (lane padded)
        ],
        out_specs=(
            pl.BlockSpec((B, Lp), lambda p: (0, 0)),            # mu
            pl.BlockSpec((B, Lp), lambda p: (0, 0)),            # sigma
            pl.BlockSpec((B, N, Lp), lambda p: (0, 0, 0)),      # samples
        ),
        scratch_shapes=[pltpu.VMEM((B, F, LANE), jnp.float32)], # lane-wide pooled partial
    )

    mu_p, sigma_p, samples_p = pl.pallas_call(
        kernel,
        out_shape=(
            jax.ShapeDtypeStruct((B, Lp), jnp.float32),
            jax.ShapeDtypeStruct((B, Lp), jnp.float32),
            jax.ShapeDtypeStruct((B, N, Lp), jnp.float32),
        ),
        grid_spec=grid_spec,
        compiler_params=pltpu.CompilerParams(
            # Single grid axis = pooling accumulation (+ heads epilogue on its
            # last step) -> must be "arbitrary"; batch-statistics BatchNorm
            # needs the whole batch on one core.
            dimension_semantics=("arbitrary",),
            vmem_limit_bytes=vmem_limit,
        ),
    )(x, conv_w_b, conv_b, corr, wml, w2, vecs, noise_p)

    # strip the lane padding (tiny slices)
    return {
        "z_mu": mu_p[:, :L],
        "z_sigma": sigma_p[:, :L],
        "z_samples": samples_p[:, :, :L],
    }


# ----------------------------------------------------------------------------
# Pure-JAX reference (same math, plain XLA) for verification.
# ----------------------------------------------------------------------------
def reference_forward(x_nchw, params, noise):
    B, C, H, W = x_nchw.shape
    hp = jax.lax.Precision.HIGHEST
    x = x_nchw.reshape(B, C, H * W)
    h = jnp.einsum("cf,bcp->bfp", params["conv_w"], x, precision=hp)
    h = jnp.maximum(h + params["conv_b"][None, :, None], 0.0)
    feat = jnp.mean(h, axis=2)                                   # (B, F)

    mu = _batchnorm(jnp.dot(feat, params["wmu"], precision=hp) + params["bmu"],
                    params["gmu"], params["betamu"])
    h1 = jnp.maximum(
        _batchnorm(jnp.dot(feat, params["w1"], precision=hp) + params["b1"],
                   params["g1"], params["beta1"]), 0.0)
    log_var = _batchnorm(jnp.dot(h1, params["w2"], precision=hp) + params["b2"],
                         params["g2"], params["beta2"])
    sigma = jnp.exp(0.5 * log_var)
    samples = mu[:, None, :] + noise * sigma[:, None, :]
    samples = samples * jax.lax.rsqrt(
        jnp.sum(samples * samples, axis=2, keepdims=True) + NORM_EPS)
    return {"z_mu": mu, "z_sigma": sigma, "z_samples": samples}


def init_params(key, C, F, L):
    ks = jax.random.split(key, 12)
    s = 0.1
    return {
        # backbone 1x1 conv
        "conv_w": s * jax.random.normal(ks[0], (C, F), jnp.float32),
        "conv_b": s * jax.random.normal(ks[1], (F,), jnp.float32),
        # fc_mu: Linear(F, L) + BatchNorm1d(L)
        "wmu": s * jax.random.normal(ks[2], (F, L), jnp.float32),
        "bmu": s * jax.random.normal(ks[3], (L,), jnp.float32),
        "gmu": 1.0 + s * jax.random.normal(ks[8], (L,), jnp.float32),
        "betamu": s * jax.random.normal(ks[9], (L,), jnp.float32),
        # fc_log_var layer 1: Linear(F, L) + BN
        "w1": s * jax.random.normal(ks[4], (F, L), jnp.float32),
        "b1": s * jax.random.normal(ks[5], (L,), jnp.float32),
        "g1": 1.0 + s * jax.random.normal(ks[10], (L,), jnp.float32),
        "beta1": s * jax.random.normal(ks[11], (L,), jnp.float32),
        # fc_log_var layer 2: Linear(L, L) + GlobalBatchNorm1d
        "w2": s * jax.random.normal(ks[6], (L, L), jnp.float32),
        "b2": s * jax.random.normal(ks[7], (L,), jnp.float32),
        "g2": jnp.ones((L,), jnp.float32),
        "beta2": jnp.zeros((L,), jnp.float32),
    }


def _check(out, ref, B, L, n_samples, tag):
    assert out["z_mu"].shape == (B, L)
    assert out["z_sigma"].shape == (B, L)
    assert out["z_samples"].shape == (B, n_samples, L)
    norms = jnp.linalg.norm(out["z_samples"], axis=2)
    assert bool(jnp.all(jnp.abs(norms - 1.0) < 1e-3)), f"{tag}: samples not unit-norm"
    for k in ("z_mu", "z_sigma", "z_samples"):
        err = float(jnp.max(jnp.abs(out[k] - ref[k])))
        assert err < 5e-2, f"{tag}: {k} mismatch vs reference: max abs err = {err}"


if __name__ == "__main__":
    B, C, H, W = 4, 4, 16, 16       # batch must be > 1 for batch-statistic BN
    F, L = 32, 16                   # in_features, latent_size
    n_samples = 4

    key = jax.random.PRNGKey(0)
    kx, knoise, kparam, kx2 = jax.random.split(key, 4)

    x = jax.random.normal(kx, (B, C, H, W), jnp.float32)
    noise = jax.random.normal(knoise, (B, n_samples, L), jnp.float32)
    params = init_params(kparam, C, F, L)

    # Small spatial tile (128) so the demo exercises the multi-chunk pooling
    # accumulator path; real sizes would use the default (larger) tile.
    out = uncertainty_module_forward(x, params, noise, max_spatial_tile=128)
    jax.block_until_ready(out)
    _check(out, reference_forward(x, params, noise), B, L, n_samples, "even")

    # Ragged spatial case (H*W = 100, not a multiple of 128): exercises the
    # zero-pad + exact ReLU(bias) correction path.
    x2 = jax.random.normal(kx2, (B, C, 10, 10), jnp.float32)
    out2 = uncertainty_module_forward(x2, params, noise, max_spatial_tile=128)
    jax.block_until_ready(out2)
    _check(out2, reference_forward(x2, params, noise), B, L, n_samples, "ragged")

    print("KERNEL_OK")
</pallas_src>

<mosaic_0001>
module attributes {stable_mosaic.version = 11 : i64} {
  func.func @kernel(%arg0: i32, %arg1: memref<4x4x128xbf16, #tpu.memory_space<vmem>>, %arg2: memref<4x32x4xbf16, #tpu.memory_space<vmem>>, %arg3: memref<1x32x1xf32, #tpu.memory_space<vmem>>, %arg4: memref<1x32xf32, #tpu.memory_space<vmem>>, %arg5: memref<32x256xf32, #tpu.memory_space<vmem>>, %arg6: memref<128x128xf32, #tpu.memory_space<vmem>>, %arg7: memref<9x128xf32, #tpu.memory_space<vmem>>, %arg8: memref<4x4x128xf32, #tpu.memory_space<vmem>>, %arg9: memref<4x128xf32, #tpu.memory_space<vmem>>, %arg10: memref<4x128xf32, #tpu.memory_space<vmem>>, %arg11: memref<4x4x128xf32, #tpu.memory_space<vmem>>, %arg12: memref<4x32x128xf32, #tpu.memory_space<vmem>>) attributes {dimension_semantics = [#tpu.dimension_semantics<arbitrary>], iteration_bounds = array<i64: 2>, scalar_prefetch = 0 : i64, scratch_operands = 1 : i64, tpu.core_type = #tpu.core_type<tc>, window_params = [{transform_indices = @transform_0, window_bounds = array<i64: 4, 4, 128>}, {pipeline_mode = #tpu.pipeline_mode<synchronous>, transform_indices = @transform_1, window_bounds = array<i64: 4, 32, 4>}, {pipeline_mode = #tpu.pipeline_mode<synchronous>, transform_indices = @transform_2, window_bounds = array<i64: 1, 32, 1>}, {pipeline_mode = #tpu.pipeline_mode<synchronous>, transform_indices = @transform_3, window_bounds = array<i64: 1, 32>}, {pipeline_mode = #tpu.pipeline_mode<synchronous>, transform_indices = @transform_4, window_bounds = array<i64: 32, 256>}, {pipeline_mode = #tpu.pipeline_mode<synchronous>, transform_indices = @transform_5, window_bounds = array<i64: 128, 128>}, {pipeline_mode = #tpu.pipeline_mode<synchronous>, transform_indices = @transform_6, window_bounds = array<i64: 9, 128>}, {pipeline_mode = #tpu.pipeline_mode<synchronous>, transform_indices = @transform_7, window_bounds = array<i64: 4, 4, 128>}, {pipeline_mode = #tpu.pipeline_mode<synchronous>, transform_indices = @transform_8, window_bounds = array<i64: 4, 128>}, {pipeline_mode = #tpu.pipeline_mode<synchronous>, transform_indices = @transform_9, window_bounds = array<i64: 4, 128>}, {pipeline_mode = #tpu.pipeline_mode<synchronous>, transform_indices = @transform_10, window_bounds = array<i64: 4, 4, 128>}]} {
    %c0_i32 = arith.constant 0 : i32
    %0 = arith.cmpi eq, %arg0, %c0_i32 : i32
    %1 = arith.extui %0 : i1 to i32
    %c0_i32_0 = arith.constant 0 : i32
    %2 = arith.cmpi ne, %1, %c0_i32_0 : i32
    scf.if %2 {
      %cst_17 = arith.constant 0.000000e+00 : f32
      %17 = vector.broadcast %cst_17 : f32 to vector<4x32x128xf32>
      %c0_18 = arith.constant 0 : index
      %c0_19 = arith.constant 0 : index
      %c0_20 = arith.constant 0 : index
      %18 = vector.load %arg12[%c0_18, %c0_19, %c0_20] : memref<4x32x128xf32, #tpu.memory_space<vmem>>, vector<4x32x128xf32>
      tpu.vector_store %arg12[%c0_18, %c0_19, %c0_20], %17 {strides = array<i32>} : memref<4x32x128xf32, #tpu.memory_space<vmem>>, vector<4x32x128xf32>,
    } else {
    }
    %c0 = arith.constant 0 : index
    %c0_1 = arith.constant 0 : index
    %c0_2 = arith.constant 0 : index
    %3 = vector.load %arg2[%c0, %c0_1, %c0_2] : memref<4x32x4xbf16, #tpu.memory_space<vmem>>, vector<4x32x4xbf16>
    %c0_3 = arith.constant 0 : index
    %c0_4 = arith.constant 0 : index
    %c0_5 = arith.constant 0 : index
    %4 = vector.load %arg1[%c0_3, %c0_4, %c0_5] : memref<4x4x128xbf16, #tpu.memory_space<vmem>>, vector<4x4x128xbf16>
    "tpu.trace_start"() <{level = 10 : i32, message = "bfc,bcp->bfp"}> : () -> ()
    %cst = arith.constant dense<0.000000e+00> : vector<4x32x128xf32>
    %5 = tpu.matmul %3, %4, %cst {dimension_numbers = #tpu.dot_dimension_numbers<[2], [1], [1], [2], [0, 0, 0, 1, 1, 2], [0], [0]>} : vector<4x32x4xbf16>, vector<4x4x128xbf16>, vector<4x32x128xf32> -> vector<4x32x128xf32>
    "tpu.trace_stop"() : () -> ()
    %c0_6 = arith.constant 0 : index
    %c0_7 = arith.constant 0 : index
    %c0_8 = arith.constant 0 : index
    %6 = vector.load %arg3[%c0_6, %c0_7, %c0_8] : memref<1x32x1xf32, #tpu.memory_space<vmem>>, vector<1x32x1xf32>
    %7 = vector.broadcast %6 : vector<1x32x1xf32> to vector<4x32x128xf32>
    %8 = arith.addf %5, %7 : vector<4x32x128xf32>
    %cst_9 = arith.constant 0.000000e+00 : f32
    %9 = vector.broadcast %cst_9 : f32 to vector<4x32x128xf32>
    %10 = arith.maximumf %8, %9 : vector<4x32x128xf32>
    %c0_10 = arith.constant 0 : index
    %c0_11 = arith.constant 0 : index
    %c0_12 = arith.constant 0 : index
    %11 = vector.load %arg12[%c0_10, %c0_11, %c0_12] : memref<4x32x128xf32, #tpu.memory_space<vmem>>, vector<4x32x128xf32>
    %12 = arith.addf %11, %10 : vector<4x32x128xf32>
    %c0_13 = arith.constant 0 : index
    %c0_14 = arith.constant 0 : index
    %c0_15 = arith.constant 0 : index
    %13 = vector.load %arg12[%c0_13, %c0_14, %c0_15] : memref<4x32x128xf32, #tpu.memory_space<vmem>>, vector<4x32x128xf32>
    tpu.vector_store %arg12[%c0_13, %c0_14, %c0_15], %12 {strides = array<i32>} : memref<4x32x128xf32, #tpu.memory_space<vmem>>, vector<4x32x128xf32>,
    %c1_i32 = arith.constant 1 : i32
    %14 = arith.cmpi eq, %arg0, %c1_i32 : i32
    %15 = arith.extui %14 : i1 to i32
    %c0_i32_16 = arith.constant 0 : i32
    %16 = arith.cmpi ne, %15, %c0_i32_16 : i32
    scf.if %16 {
      %c0_17 = arith.constant 0 : index
      %c0_18 = arith.constant 0 : index
      %c0_19 = arith.constant 0 : index
      %17 = vector.load %arg12[%c0_17, %c0_18, %c0_19] : memref<4x32x128xf32, #tpu.memory_space<vmem>>, vector<4x32x128xf32>
      %cst_20 = arith.constant dense<0.000000e+00> : vector<4x32xf32>
      %18 = vector.multi_reduction <add>, %17, %cst_20 [2] : vector<4x32x128xf32> to vector<4x32xf32>
      %cst_21 = arith.constant 3.906250e-03 : f32
      %19 = vector.broadcast %cst_21 : f32 to vector<4x32xf32>
      %20 = arith.mulf %18, %19 : vector<4x32xf32>
      %c0_22 = arith.constant 0 : index
      %c0_23 = arith.constant 0 : index
      %21 = vector.load %arg4[%c0_22, %c0_23] : memref<1x32xf32, #tpu.memory_space<vmem>>, vector<1x32xf32>
      %22 = vector.broadcast %21 : vector<1x32xf32> to vector<4x32xf32>
      %23 = arith.subf %20, %22 : vector<4x32xf32>
      %c0_24 = arith.constant 0 : index
      %c0_25 = arith.constant 0 : index
      %24 = vector.load %arg7[%c0_24, %c0_25] : memref<9x128xf32, #tpu.memory_space<vmem>>, vector<9x128xf32>
      %25 = vector.extract_strided_slice %24 {offsets = [0, 0], sizes = [1, 128], strides = [1, 1]} : vector<9x128xf32> to vector<1x128xf32>
      %26 = vector.extract_strided_slice %24 {offsets = [1, 0], sizes = [1, 128], strides = [1, 1]} : vector<9x128xf32> to vector<1x128xf32>
      %27 = vector.extract_strided_slice %24 {offsets = [2, 0], sizes = [1, 128], strides = [1, 1]} : vector<9x128xf32> to vector<1x128xf32>
      %28 = vector.extract_strided_slice %24 {offsets = [3, 0], sizes = [1, 128], strides = [1, 1]} : vector<9x128xf32> to vector<1x128xf32>
      %29 = vector.extract_strided_slice %24 {offsets = [4, 0], sizes = [1, 128], strides = [1, 1]} : vector<9x128xf32> to vector<1x128xf32>
      %30 = vector.extract_strided_slice %24 {offsets = [5, 0], sizes = [1, 128], strides = [1, 1]} : vector<9x128xf32> to vector<1x128xf32>
      %31 = vector.extract_strided_slice %24 {offsets = [6, 0], sizes = [1, 128], strides = [1, 1]} : vector<9x128xf32> to vector<1x128xf32>
      %32 = vector.extract_strided_slice %24 {offsets = [7, 0], sizes = [1, 128], strides = [1, 1]} : vector<9x128xf32> to vector<1x128xf32>
      %33 = vector.extract_strided_slice %24 {offsets = [8, 0], sizes = [1, 128], strides = [1, 1]} : vector<9x128xf32> to vector<1x128xf32>
      %c0_26 = arith.constant 0 : index
      %c0_27 = arith.constant 0 : index
      %34 = vector.load %arg5[%c0_26, %c0_27] : memref<32x256xf32, #tpu.memory_space<vmem>>, vector<32x256xf32>
      %cst_28 = arith.constant dense<0.000000e+00> : vector<4x256xf32>
      %35 = tpu.matmul %23, %34, %cst_28 {dimension_numbers = #tpu.dot_dimension_numbers<[1], [0], [0], [1], [0, 0, 1, 1], [], []>} : vector<4x32xf32>, vector<32x256xf32>, vector<4x256xf32> -> vector<4x256xf32>
      %36 = vector.extract_strided_slice %35 {offsets = [0, 0], sizes = [4, 128], strides = [1, 1]} : vector<4x256xf32> to vector<4x128xf32>
      %37 = vector.broadcast %25 : vector<1x128xf32> to vector<4x128xf32>
      %38 = arith.addf %36, %37 : vector<4x128xf32>
      %cst_29 = arith.constant dense<0.000000e+00> : vector<128xf32>
      %39 = vector.multi_reduction <add>, %38, %cst_29 [0] : vector<4x128xf32> to vector<128xf32>
      %40 = vector.shape_cast %39 : vector<128xf32> to vector<1x128xf32>
      %cst_30 = arith.constant 4.000000e+00 : f32
      %41 = vector.broadcast %cst_30 : f32 to vector<1x128xf32>
      %42 = arith.divf %40, %41 : vector<1x128xf32>
      %43 = vector.broadcast %42 : vector<1x128xf32> to vector<4x128xf32>
      %44 = arith.subf %38, %43 : vector<4x128xf32>
      %45 = arith.mulf %44, %44 : vector<4x128xf32>
      %cst_31 = arith.constant dense<0.000000e+00> : vector<128xf32>
      %46 = vector.multi_reduction <add>, %45, %cst_31 [0] : vector<4x128xf32> to vector<128xf32>
      %47 = vector.shape_cast %46 : vector<128xf32> to vector<1x128xf32>
      %cst_32 = arith.constant 4.000000e+00 : f32
      %48 = vector.broadcast %cst_32 : f32 to vector<1x128xf32>
      %49 = arith.divf %47, %48 : vector<1x128xf32>
      %50 = vector.broadcast %42 : vector<1x128xf32> to vector<4x128xf32>
      %51 = arith.subf %38, %50 : vector<4x128xf32>
      %52 = vector.broadcast %26 : vector<1x128xf32> to vector<4x128xf32>
      %53 = arith.mulf %52, %51 : vector<4x128xf32>
      %cst_33 = arith.constant 9.99999974E-6 : f32
      %54 = vector.broadcast %cst_33 : f32 to vector<1x128xf32>
      %55 = arith.addf %49, %54 : vector<1x128xf32>
      %56 = math.rsqrt %55 : vector<1x128xf32>
      %57 = vector.broadcast %56 : vector<1x128xf32> to vector<4x128xf32>
      %58 = arith.mulf %53, %57 : vector<4x128xf32>
      %59 = vector.broadcast %27 : vector<1x128xf32> to vector<4x128xf32>
      %60 = arith.addf %58, %59 : vector<4x128xf32>
      %61 = vector.extract_strided_slice %35 {offsets = [0, 128], sizes = [4, 128], strides = [1, 1]} : vector<4x256xf32> to vector<4x128xf32>
      %62 = vector.broadcast %28 : vector<1x128xf32> to vector<4x128xf32>
      %63 = arith.addf %61, %62 : vector<4x128xf32>
      %cst_34 = arith.constant dense<0.000000e+00> : vector<128xf32>
      %64 = vector.multi_reduction <add>, %63, %cst_34 [0] : vector<4x128xf32> to vector<128xf32>
      %65 = vector.shape_cast %64 : vector<128xf32> to vector<1x128xf32>
      %cst_35 = arith.constant 4.000000e+00 : f32
      %66 = vector.broadcast %cst_35 : f32 to vector<1x128xf32>
      %67 = arith.divf %65, %66 : vector<1x128xf32>
      %68 = vector.broadcast %67 : vector<1x128xf32> to vector<4x128xf32>
      %69 = arith.subf %63, %68 : vector<4x128xf32>
      %70 = arith.mulf %69, %69 : vector<4x128xf32>
      %cst_36 = arith.constant dense<0.000000e+00> : vector<128xf32>
      %71 = vector.multi_reduction <add>, %70, %cst_36 [0] : vector<4x128xf32> to vector<128xf32>
      %72 = vector.shape_cast %71 : vector<128xf32> to vector<1x128xf32>
      %cst_37 = arith.constant 4.000000e+00 : f32
      %73 = vector.broadcast %cst_37 : f32 to vector<1x128xf32>
      %74 = arith.divf %72, %73 : vector<1x128xf32>
      %75 = vector.broadcast %67 : vector<1x128xf32> to vector<4x128xf32>
      %76 = arith.subf %63, %75 : vector<4x128xf32>
      %77 = vector.broadcast %29 : vector<1x128xf32> to vector<4x128xf32>
      %78 = arith.mulf %77, %76 : vector<4x128xf32>
      %cst_38 = arith.constant 9.99999974E-6 : f32
      %79 = vector.broadcast %cst_38 : f32 to vector<1x128xf32>
      %80 = arith.addf %74, %79 : vector<1x128xf32>
      %81 = math.rsqrt %80 : vector<1x128xf32>
      %82 = vector.broadcast %81 : vector<1x128xf32> to vector<4x128xf32>
      %83 = arith.mulf %78, %82 : vector<4x128xf32>
      %84 = vector.broadcast %30 : vector<1x128xf32> to vector<4x128xf32>
      %85 = arith.addf %83, %84 : vector<4x128xf32>
      %cst_39 = arith.constant 0.000000e+00 : f32
      %86 = vector.broadcast %cst_39 : f32 to vector<4x128xf32>
      %87 = arith.maximumf %85, %86 : vector<4x128xf32>
      %c0_40 = arith.constant 0 : index
      %c0_41 = arith.constant 0 : index
      %88 = vector.load %arg6[%c0_40, %c0_41] : memref<128x128xf32, #tpu.memory_space<vmem>>, vector<128x128xf32>
      %cst_42 = arith.constant dense<0.000000e+00> : vector<4x128xf32>
      %89 = tpu.matmul %87, %88, %cst_42 {dimension_numbers = #tpu.dot_dimension_numbers<[1], [0], [0], [1], [0, 0, 1, 1], [], []>} : vector<4x128xf32>, vector<128x128xf32>, vector<4x128xf32> -> vector<4x128xf32>
      %90 = vector.broadcast %31 : vector<1x128xf32> to vector<4x128xf32>
      %91 = arith.addf %89, %90 : vector<4x128xf32>
      %cst_43 = arith.constant dense<0.000000e+00> : vector<128xf32>
      %92 = vector.multi_reduction <add>, %91, %cst_43 [0] : vector<4x128xf32> to vector<128xf32>
      %93 = vector.shape_cast %92 : vector<128xf32> to vector<1x128xf32>
      %cst_44 = arith.constant 4.000000e+00 : f32
      %94 = vector.broadcast %cst_44 : f32 to vector<1x128xf32>
      %95 = arith.divf %93, %94 : vector<1x128xf32>
      %96 = vector.broadcast %95 : vector<1x128xf32> to vector<4x128xf32>
      %97 = arith.subf %91, %96 : vector<4x128xf32>
      %98 = arith.mulf %97, %97 : vector<4x128xf32>
      %cst_45 = arith.constant dense<0.000000e+00> : vector<128xf32>
      %99 = vector.multi_reduction <add>, %98, %cst_45 [0] : vector<4x128xf32> to vector<128xf32>
      %100 = vector.shape_cast %99 : vector<128xf32> to vector<1x128xf32>
      %cst_46 = arith.constant 4.000000e+00 : f32
      %101 = vector.broadcast %cst_46 : f32 to vector<1x128xf32>
      %102 = arith.divf %100, %101 : vector<1x128xf32>
      %103 = vector.broadcast %95 : vector<1x128xf32> to vector<4x128xf32>
      %104 = arith.subf %91, %103 : vector<4x128xf32>
      %105 = vector.broadcast %32 : vector<1x128xf32> to vector<4x128xf32>
      %106 = arith.mulf %105, %104 : vector<4x128xf32>
      %cst_47 = arith.constant 9.99999974E-6 : f32
      %107 = vector.broadcast %cst_47 : f32 to vector<1x128xf32>
      %108 = arith.addf %102, %107 : vector<1x128xf32>
      %109 = math.rsqrt %108 : vector<1x128xf32>
      %110 = vector.broadcast %109 : vector<1x128xf32> to vector<4x128xf32>
      %111 = arith.mulf %106, %110 : vector<4x128xf32>
      %112 = vector.broadcast %33 : vector<1x128xf32> to vector<4x128xf32>
      %113 = arith.addf %111, %112 : vector<4x128xf32>
      %cst_48 = arith.constant 5.000000e-01 : f32
      %114 = vector.broadcast %cst_48 : f32 to vector<4x128xf32>
      %115 = arith.mulf %114, %113 : vector<4x128xf32>
      %116 = math.exp %115 : vector<4x128xf32>
      %c0_49 = arith.constant 0 : index
      %c0_50 = arith.constant 0 : index
      %c0_51 = arith.constant 0 : index
      %117 = vector.load %arg8[%c0_49, %c0_50, %c0_51] : memref<4x4x128xf32, #tpu.memory_space<vmem>>, vector<4x4x128xf32>
      %118 = vector.shape_cast %60 : vector<4x128xf32> to vector<4x1x128xf32>
      %119 = vector.shape_cast %116 : vector<4x128xf32> to vector<4x1x128xf32>
      %120 = vector.broadcast %119 : vector<4x1x128xf32> to vector<4x4x128xf32>
      %121 = arith.mulf %117, %120 : vector<4x4x128xf32>
      %122 = vector.broadcast %118 : vector<4x1x128xf32> to vector<4x4x128xf32>
      %123 = arith.addf %122, %121 : vector<4x4x128xf32>
      %124 = arith.mulf %123, %123 : vector<4x4x128xf32>
      %cst_52 = arith.constant dense<0.000000e+00> : vector<4x4xf32>
      %125 = vector.multi_reduction <add>, %124, %cst_52 [2] : vector<4x4x128xf32> to vector<4x4xf32>
      %126 = vector.shape_cast %125 : vector<4x4xf32> to vector<4x4x1xf32>
      %cst_53 = arith.constant 9.99999996E-13 : f32
      %127 = vector.broadcast %cst_53 : f32 to vector<4x4x1xf32>
      %128 = arith.addf %126, %127 : vector<4x4x1xf32>
      %129 = math.rsqrt %128 : vector<4x4x1xf32>
      %130 = vector.broadcast %129 : vector<4x4x1xf32> to vector<4x4x128xf32>
      %131 = arith.mulf %123, %130 : vector<4x4x128xf32>
      %c0_54 = arith.constant 0 : index
      %c0_55 = arith.constant 0 : index
      %132 = vector.load %arg9[%c0_54, %c0_55] : memref<4x128xf32, #tpu.memory_space<vmem>>, vector<4x128xf32>
      tpu.vector_store %arg9[%c0_54, %c0_55], %60 {strides = array<i32>} : memref<4x128xf32, #tpu.memory_space<vmem>>, vector<4x128xf32>,
      %c0_56 = arith.constant 0 : index
      %c0_57 = arith.constant 0 : index
      %133 = vector.load %arg10[%c0_56, %c0_57] : memref<4x128xf32, #tpu.memory_space<vmem>>, vector<4x128xf32>
      tpu.vector_store %arg10[%c0_56, %c0_57], %116 {strides = array<i32>} : memref<4x128xf32, #tpu.memory_space<vmem>>, vector<4x128xf32>,
      %c0_58 = arith.constant 0 : index
      %c0_59 = arith.constant 0 : index
      %c0_60 = arith.constant 0 : index
      %134 = vector.load %arg11[%c0_58, %c0_59, %c0_60] : memref<4x4x128xf32, #tpu.memory_space<vmem>>, vector<4x4x128xf32>
      tpu.vector_store %arg11[%c0_58, %c0_59, %c0_60], %131 {strides = array<i32>} : memref<4x4x128xf32, #tpu.memory_space<vmem>>, vector<4x4x128xf32>,
    } else {
    }
    return
  }
  func.func @transform_0(%arg0: i32) -> (i32, i32, i32) {
    %c0_i32 = arith.constant 0 : i32
    %c0_i32_0 = arith.constant 0 : i32
    %c0_i32_1 = arith.constant 0 : i32
    return %c0_i32, %c0_i32_0, %arg0 : i32, i32, i32
  }
  func.func @transform_1(%arg0: i32) -> (i32, i32, i32) {
    %c0_i32 = arith.constant 0 : i32
    %c0_i32_0 = arith.constant 0 : i32
    %c0_i32_1 = arith.constant 0 : i32
    %c0_i32_2 = arith.constant 0 : i32
    return %c0_i32, %c0_i32_0, %c0_i32_1 : i32, i32, i32
  }
  func.func @transform_2(%arg0: i32) -> (i32, i32, i32) {
    %c0_i32 = arith.constant 0 : i32
    %c0_i32_0 = arith.constant 0 : i32
    %c0_i32_1 = arith.constant 0 : i32
    %c0_i32_2 = arith.constant 0 : i32
    return %c0_i32, %c0_i32_0, %c0_i32_1 : i32, i32, i32
  }
  func.func @transform_3(%arg0: i32) -> (i32, i32) {
    %c0_i32 = arith.constant 0 : i32
    %c0_i32_0 = arith.constant 0 : i32
    %c0_i32_1 = arith.constant 0 : i32
    return %c0_i32, %c0_i32_0 : i32, i32
  }
  func.func @transform_4(%arg0: i32) -> (i32, i32) {
    %c0_i32 = arith.constant 0 : i32
    %c0_i32_0 = arith.constant 0 : i32
    %c0_i32_1 = arith.constant 0 : i32
    return %c0_i32, %c0_i32_0 : i32, i32
  }
  func.func @transform_5(%arg0: i32) -> (i32, i32) {
    %c0_i32 = arith.constant 0 : i32
    %c0_i32_0 = arith.constant 0 : i32
    %c0_i32_1 = arith.constant 0 : i32
    return %c0_i32, %c0_i32_0 : i32, i32
  }
  func.func @transform_6(%arg0: i32) -> (i32, i32) {
    %c0_i32 = arith.constant 0 : i32
    %c0_i32_0 = arith.constant 0 : i32
    %c0_i32_1 = arith.constant 0 : i32
    return %c0_i32, %c0_i32_0 : i32, i32
  }
  func.func @transform_7(%arg0: i32) -> (i32, i32, i32) {
    %c0_i32 = arith.constant 0 : i32
    %c0_i32_0 = arith.constant 0 : i32
    %c0_i32_1 = arith.constant 0 : i32
    %c0_i32_2 = arith.constant 0 : i32
    return %c0_i32, %c0_i32_0, %c0_i32_1 : i32, i32, i32
  }
  func.func @transform_8(%arg0: i32) -> (i32, i32) {
    %c0_i32 = arith.constant 0 : i32
    %c0_i32_0 = arith.constant 0 : i32
    %c0_i32_1 = arith.constant 0 : i32
    return %c0_i32, %c0_i32_0 : i32, i32
  }
  func.func @transform_9(%arg0: i32) -> (i32, i32) {
    %c0_i32 = arith.constant 0 : i32
    %c0_i32_0 = arith.constant 0 : i32
    %c0_i32_1 = arith.constant 0 : i32
    return %c0_i32, %c0_i32_0 : i32, i32
  }
  func.func @transform_10(%arg0: i32) -> (i32, i32, i32) {
    %c0_i32 = arith.constant 0 : i32
    %c0_i32_0 = arith.constant 0 : i32
    %c0_i32_1 = arith.constant 0 : i32
    %c0_i32_2 = arith.constant 0 : i32
    return %c0_i32, %c0_i32_0, %c0_i32_1 : i32, i32, i32
  }
}

</mosaic_0001>

<llo_original>
// kernel: uncertainty_module_forward.1
$region0: #{uncertainty_module_forward.1}
  #allocation0 [shape = 'u32[]', space=smem, size = 0x4, offset = 0x4, fixed_abs, tag = 'smem constant byte address 0x4 - core index']
  #allocation1 [shape = 'u32[144,128]{1,0:T(1,128)}', space=vmem, size = 0x12000, scoped, tag = 'internal scratch']
  #allocation2 [shape = 'f32[4,32,128]{2,1,0:T(8,128)}', space=vmem, size = 0x10000, scoped, tag = 'scratch operand']
  %s0 = inlined_call_operand.vmem [shape: bf16[4,4,256], index: 0, kind: input, shape index: {}]
  %s1 = inlined_call_operand.vmem [shape: bf16[4,32,4], index: 1, kind: input, shape index: {}]
  %s2 = inlined_call_operand.vmem [shape: f32[1,32,1], index: 2, kind: input, shape index: {}]
  %s3 = inlined_call_operand.vmem [shape: f32[1,32], index: 3, kind: input, shape index: {}]
  %s4 = inlined_call_operand.vmem [shape: f32[32,256], index: 4, kind: input, shape index: {}]
  %s5 = inlined_call_operand.vmem [shape: f32[128,128], index: 5, kind: input, shape index: {}]
  %s6 = inlined_call_operand.vmem [shape: f32[9,128], index: 6, kind: input, shape index: {}]
  %s7 = inlined_call_operand.vmem [shape: f32[4,4,128], index: 7, kind: input, shape index: {}]
  %s8 = inlined_call_operand.hbm [shape: f32[4,128], index: 8, kind: output, shape index: {0}]
  %s9 = inlined_call_operand.hbm [shape: f32[4,128], index: 9, kind: output, shape index: {1}]
  %s10 = inlined_call_operand.hbm [shape: f32[4,4,128], index: 10, kind: output, shape index: {2}]
  %11 = xla_tuple %s8, %s9, %s10
  %s12 = sld [smem:[#allocation0]]
  $region130: #{uncertainty_module_forward.1} parent=0
    _
  %s14 = ssub.s32 1, %s12
  %s15 = scalar_select 0, %s14, %s12
  $region1: #{uncertainty_module_forward.1} parent=0
    #allocation3 [shape = 'u8[8192]{0}', space=vmem, size = 0x2000, scoped, tag = 'input window, operand 0']
    #allocation4 [shape = 'u8[2048]{0}', space=vmem, size = 0x800, scoped, tag = 'output window, operand 0, single buffered']
    #allocation5 [shape = 's32[2]{0}', space=sflag, size = 0x8, scoped, tag = 'scoped memory for uncertainty_module_forward.1']
    #allocation6 [shape = 'u8[2048]{0}', space=vmem, size = 0x800, scoped, tag = 'output window, operand 1, single buffered']
    #allocation7 [shape = 's32[1]{0}', space=sflag, size = 0x4, scoped, tag = 'scoped memory for uncertainty_module_forward.1']
    #allocation8 [shape = 'u8[8192]{0}', space=vmem, size = 0x2000, scoped, tag = 'output window, operand 2, single buffered']
    %16 = vsyncpa [#allocation5], 0
    %17 = vsyncpa [#allocation7], 0
    loop: start=0, step=1, limit=4
    $region2: #{uncertainty_module_forward.1} parent=1 // loop_pre_header
      _
    $region3: #{uncertainty_module_forward.1} parent=1 // loop_header
      %s19 = sphi 0, %s23
      %p20 = scmp.ge.s32.totalorder %s19, 4
      %s29 = sphi 0, %s31
      %s32 = sphi 0, %s29
      %s33 = sphi 0, %s32
      %s49 = sphi 0, %s33
      %s53 = sphi 0, %s53
      %s55 = sphi 0, %s53
      %s56 = sphi 0, %s55
      %s70 = sphi 0, %s56
      %s74 = sphi 0, %s74
      %s76 = sphi 0, %s74
      %s77 = sphi 0, %s76
      %s91 = sphi 0, %s77
      %s95 = sphi 0, %s95
      %s97 = sphi 0, %s95
      %s98 = sphi 0, %s97
      %s112 = sphi 0, %s98
      %s116 = sphi 0, %s116
      %s118 = sphi 0, %s116
      %s119 = sphi 0, %s118
      %s133 = sphi 0, %s119
      %s137 = sphi 0, %s137
      %s139 = sphi 0, %s137
      %s140 = sphi 0, %s139
      %s154 = sphi 0, %s140
      %s158 = sphi 0, %s158
      %s160 = sphi 0, %s158
      %s161 = sphi 0, %s160
      %s175 = sphi 0, %s161
      %s179 = sphi 0, %s179
      %s181 = sphi 0, %s179
      %s182 = sphi 0, %s181
      %s196 = sphi 0, %s182
      %s200 = sphi 0, %s200
      %s202 = sphi 0, %s200
      %s203 = sphi 0, %s202
      %s217 = sphi 0, %s203
      %s221 = sphi 0, %s221
      %s223 = sphi 0, %s221
      %s224 = sphi 0, %s223
      %s238 = sphi 0, %s224
      %s242 = sphi 0, %s242
      %s244 = sphi 0, %s242
      %s245 = sphi 0, %s244
      %s259 = sphi 0, %s245
    $region4: #{uncertainty_module_forward.1} parent=1 // loop_header_branch
      %22 = sbr.rel (%p20) target = $region8
    $region5: #{uncertainty_module_forward.1} parent=1 // loop_body
      %s24 = ssub.s32 %s19, 1
      %s25 = ssub.s32 %s19, 2
      %s26 = sadd.s32 %s19, 1
      %s27 = ssub.s32 %s19, %s26
      %p28 = scmp.eq.s32.totalorder %s27, 0
      %s30 = sadd.s32 %s29, 1
      %s31 = scalar_select %p28, %s29, %s30
      %p34 = pneg %p28
      %p35 = scmp.eq.s32.totalorder %s19, 1
      %p36 = por %p34, %p35
      %p37 = scmp.ne.s32.totalorder %s29, %s32
      %p38 = scmp.eq.s32.totalorder %s19, 0
      %p39 = por %p37, %p38
      %p40 = scmp.ne.s32.totalorder %s29, %s32
      %p41 = scmp.eq.s32.totalorder %s24, 1
      %p42 = por %p40, %p41
      %p43 = scmp.ne.s32.totalorder %s32, %s33
      %p44 = scmp.eq.s32.totalorder %s24, 0
      %p45 = por %p43, %p44
      %p46 = scmp.ne.s32.totalorder %s32, %s33
      %p47 = scmp.eq.s32.totalorder %s25, 1
      %p48 = por %p46, %p47
      %p50 = scmp.ne.s32.totalorder %s33, %s49
      %p51 = scmp.eq.s32.totalorder %s25, 0
      %p52 = por %p50, %p51
      %s54 = sadd.s32 %s53, 1
      %p57 = scmp.eq.s32.totalorder %s19, 1
      %p58 = scmp.ne.s32.totalorder %s53, %s55
      %p59 = scmp.eq.s32.totalorder %s19, 0
      %p60 = por %p58, %p59
      %p61 = scmp.ne.s32.totalorder %s53, %s55
      %p62 = scmp.eq.s32.totalorder %s24, 1
      %p63 = por %p61, %p62
      %p64 = scmp.ne.s32.totalorder %s55, %s56
      %p65 = scmp.eq.s32.totalorder %s24, 0
      %p66 = por %p64, %p65
      %p67 = scmp.ne.s32.totalorder %s55, %s56
      %p68 = scmp.eq.s32.totalorder %s25, 1
      %p69 = por %p67, %p68
      %p71 = scmp.ne.s32.totalorder %s56, %s70
      %p72 = scmp.eq.s32.totalorder %s25, 0
      %p73 = por %p71, %p72
      %s75 = sadd.s32 %s74, 1
      %p78 = scmp.eq.s32.totalorder %s19, 1
      %p79 = scmp.ne.s32.totalorder %s74, %s76
      %p80 = scmp.eq.s32.totalorder %s19, 0
      %p81 = por %p79, %p80
      %p82 = scmp.ne.s32.totalorder %s74, %s76
      %p83 = scmp.eq.s32.totalorder %s24, 1
      %p84 = por %p82, %p83
      %p85 = scmp.ne.s32.totalorder %s76, %s77
      %p86 = scmp.eq.s32.totalorder %s24, 0
      %p87 = por %p85, %p86
      %p88 = scmp.ne.s32.totalorder %s76, %s77
      %p89 = scmp.eq.s32.totalorder %s25, 1
      %p90 = por %p88, %p89
      %p92 = scmp.ne.s32.totalorder %s77, %s91
      %p93 = scmp.eq.s32.totalorder %s25, 0
      %p94 = por %p92, %p93
      %s96 = sadd.s32 %s95, 1
      %p99 = scmp.eq.s32.totalorder %s19, 1
      %p100 = scmp.ne.s32.totalorder %s95, %s97
      %p101 = scmp.eq.s32.totalorder %s19, 0
      %p102 = por %p100, %p101
      %p103 = scmp.ne.s32.totalorder %s95, %s97
      %p104 = scmp.eq.s32.totalorder %s24, 1
      %p105 = por %p103, %p104
      %p106 = scmp.ne.s32.totalorder %s97, %s98
      %p107 = scmp.eq.s32.totalorder %s24, 0
      %p108 = por %p106, %p107
      %p109 = scmp.ne.s32.totalorder %s97, %s98
      %p110 = scmp.eq.s32.totalorder %s25, 1
      %p111 = por %p109, %p110
      %p113 = scmp.ne.s32.totalorder %s98, %s112
      %p114 = scmp.eq.s32.totalorder %s25, 0
      %p115 = por %p113, %p114
      %s117 = sadd.s32 %s116, 1
      %p120 = scmp.eq.s32.totalorder %s19, 1
      %p121 = scmp.ne.s32.totalorder %s116, %s118
      %p122 = scmp.eq.s32.totalorder %s19, 0
      %p123 = por %p121, %p122
      %p124 = scmp.ne.s32.totalorder %s116, %s118
      %p125 = scmp.eq.s32.totalorder %s24, 1
      %p126 = por %p124, %p125
      %p127 = scmp.ne.s32.totalorder %s118, %s119
      %p128 = scmp.eq.s32.totalorder %s24, 0
      %p129 = por %p127, %p128
      %p130 = scmp.ne.s32.totalorder %s118, %s119
      %p131 = scmp.eq.s32.totalorder %s25, 1
      %p132 = por %p130, %p131
      %p134 = scmp.ne.s32.totalorder %s119, %s133
      %p135 = scmp.eq.s32.totalorder %s25, 0
      %p136 = por %p134, %p135
      %s138 = sadd.s32 %s137, 1
      %p141 = scmp.eq.s32.totalorder %s19, 1
      %p142 = scmp.ne.s32.totalorder %s137, %s139
      %p143 = scmp.eq.s32.totalorder %s19, 0
      %p144 = por %p142, %p143
      %p145 = scmp.ne.s32.totalorder %s137, %s139
      %p146 = scmp.eq.s32.totalorder %s24, 1
      %p147 = por %p145, %p146
      %p148 = scmp.ne.s32.totalorder %s139, %s140
      %p149 = scmp.eq.s32.totalorder %s24, 0
      %p150 = por %p148, %p149
      %p151 = scmp.ne.s32.totalorder %s139, %s140
      %p152 = scmp.eq.s32.totalorder %s25, 1
      %p153 = por %p151, %p152
      %p155 = scmp.ne.s32.totalorder %s140, %s154
      %p156 = scmp.eq.s32.totalorder %s25, 0
      %p157 = por %p155, %p156
      %s159 = sadd.s32 %s158, 1
      %p162 = scmp.eq.s32.totalorder %s19, 1
      %p163 = scmp.ne.s32.totalorder %s158, %s160
      %p164 = scmp.eq.s32.totalorder %s19, 0
      %p165 = por %p163, %p164
      %p166 = scmp.ne.s32.totalorder %s158, %s160
      %p167 = scmp.eq.s32.totalorder %s24, 1
      %p168 = por %p166, %p167
      %p169 = scmp.ne.s32.totalorder %s160, %s161
      %p170 = scmp.eq.s32.totalorder %s24, 0
      %p171 = por %p169, %p170
      %p172 = scmp.ne.s32.totalorder %s160, %s161
      %p173 = scmp.eq.s32.totalorder %s25, 1
      %p174 = por %p172, %p173
      %p176 = scmp.ne.s32.totalorder %s161, %s175
      %p177 = scmp.eq.s32.totalorder %s25, 0
      %p178 = por %p176, %p177
      %s180 = sadd.s32 %s179, 1
      %p183 = scmp.eq.s32.totalorder %s19, 1
      %p184 = scmp.ne.s32.totalorder %s179, %s181
      %p185 = scmp.eq.s32.totalorder %s19, 0
      %p186 = por %p184, %p185
      %p187 = scmp.ne.s32.totalorder %s179, %s181
      %p188 = scmp.eq.s32.totalorder %s24, 1
      %p189 = por %p187, %p188
      %p190 = scmp.ne.s32.totalorder %s181, %s182
      %p191 = scmp.eq.s32.totalorder %s24, 0
      %p192 = por %p190, %p191
      %p193 = scmp.ne.s32.totalorder %s181, %s182
      %p194 = scmp.eq.s32.totalorder %s25, 1
      %p195 = por %p193, %p194
      %p197 = scmp.ne.s32.totalorder %s182, %s196
      %p198 = scmp.eq.s32.totalorder %s25, 0
      %p199 = por %p197, %p198
      %s201 = sadd.s32 %s200, 1
      %p204 = scmp.eq.s32.totalorder %s19, 1
      %p205 = scmp.ne.s32.totalorder %s200, %s202
      %p206 = scmp.eq.s32.totalorder %s19, 0
      %p207 = por %p205, %p206
      %p208 = scmp.ne.s32.totalorder %s200, %s202
      %p209 = scmp.eq.s32.totalorder %s24, 1
      %p210 = por %p208, %p209
      %p211 = scmp.ne.s32.totalorder %s202, %s203
      %p212 = scmp.eq.s32.totalorder %s24, 0
      %p213 = por %p211, %p212
      %p214 = scmp.ne.s32.totalorder %s202, %s203
      %p215 = scmp.eq.s32.totalorder %s25, 1
      %p216 = por %p214, %p215
      %p218 = scmp.ne.s32.totalorder %s203, %s217
      %p219 = scmp.eq.s32.totalorder %s25, 0
      %p220 = por %p218, %p219
      %s222 = sadd.s32 %s221, 1
      %p225 = scmp.eq.s32.totalorder %s19, 1
      %p226 = scmp.ne.s32.totalorder %s221, %s223
      %p227 = scmp.eq.s32.totalorder %s19, 0
      %p228 = por %p226, %p227
      %p229 = scmp.ne.s32.totalorder %s221, %s223
      %p230 = scmp.eq.s32.totalorder %s24, 1
      %p231 = por %p229, %p230
      %p232 = scmp.ne.s32.totalorder %s223, %s224
      %p233 = scmp.eq.s32.totalorder %s24, 0
      %p234 = por %p232, %p233
      %p235 = scmp.ne.s32.totalorder %s223, %s224
      %p236 = scmp.eq.s32.totalorder %s25, 1
      %p237 = por %p235, %p236
      %p239 = scmp.ne.s32.totalorder %s224, %s238
      %p240 = scmp.eq.s32.totalorder %s25, 0
      %p241 = por %p239, %p240
      %s243 = sadd.s32 %s242, 1
      %p246 = scmp.eq.s32.totalorder %s19, 1
      %p247 = scmp.ne.s32.totalorder %s242, %s244
      %p248 = scmp.eq.s32.totalorder %s19, 0
      %p249 = por %p247, %p248
      %p250 = scmp.ne.s32.totalorder %s242, %s244
      %p251 = scmp.eq.s32.totalorder %s24, 1
      %p252 = por %p250, %p251
      %p253 = scmp.ne.s32.totalorder %s244, %s245
      %p254 = scmp.eq.s32.totalorder %s24, 0
      %p255 = por %p253, %p254
      %p256 = scmp.ne.s32.totalorder %s244, %s245
      %p257 = scmp.eq.s32.totalorder %s25, 1
      %p258 = por %p256, %p257
      %p260 = scmp.ne.s32.totalorder %s245, %s259
      %p261 = scmp.eq.s32.totalorder %s25, 0
      %p262 = por %p260, %p261
      %p263 = scmp.le.s32.totalorder 1, %s19
      %p264 = scmp.lt.s32.totalorder %s19, 3
      %p265 = pnand %p263, %p264
      %p266 = pneg %p265
      // Predicated region
      $region9: #{uncertainty_module_forward.1} parent=5 // pred_check
        _
      $region10: #{uncertainty_module_forward.1} parent=5 // pred_check_branch
        %268 = sbr.rel (%p265) target = $region12
      $region11: #{uncertainty_module_forward.1} parent=5 // pred_region
        %s269 = ssub.s32 %s19, 1
        // Predicated region
        $region13: #{uncertainty_module_forward.1} parent=11 // pred_check
          %p270 = pneg %p66
        $region14: #{uncertainty_module_forward.1} parent=11 // pred_check_branch
          %272 = sbr.rel (%p270) target = $region16
        $region15: #{uncertainty_module_forward.1} parent=11 // pred_region
          _
        $region16: #{uncertainty_module_forward.1} parent=11 // pred_fallthru
          _
        // Predicated region
        $region17: #{uncertainty_module_forward.1} parent=11 // pred_check
          %p273 = pneg %p87
        $region18: #{uncertainty_module_forward.1} parent=11 // pred_check_branch
          %275 = sbr.rel (%p273) target = $region20
        $region19: #{uncertainty_module_forward.1} parent=11 // pred_region
          _
        $region20: #{uncertainty_module_forward.1} parent=11 // pred_fallthru
          _
        // Predicated region
        $region21: #{uncertainty_module_forward.1} parent=11 // pred_check
          %p276 = pneg %p108
        $region22: #{uncertainty_module_forward.1} parent=11 // pred_check_branch
          %278 = sbr.rel (%p276) target = $region24
        $region23: #{uncertainty_module_forward.1} parent=11 // pred_region
          _
        $region24: #{uncertainty_module_forward.1} parent=11 // pred_fallthru
          _
        // Predicated region
        $region25: #{uncertainty_module_forward.1} parent=11 // pred_check
          %p279 = pneg %p129
        $region26: #{uncertainty_module_forward.1} parent=11 // pred_check_branch
          %281 = sbr.rel (%p279) target = $region28
        $region27: #{uncertainty_module_forward.1} parent=11 // pred_region
          _
        $region28: #{uncertainty_module_forward.1} parent=11 // pred_fallthru
          _
        // Predicated region
        $region29: #{uncertainty_module_forward.1} parent=11 // pred_check
          %p282 = pneg %p150
        $region30: #{uncertainty_module_forward.1} parent=11 // pred_check_branch
          %284 = sbr.rel (%p282) target = $region32
        $region31: #{uncertainty_module_forward.1} parent=11 // pred_region
          _
        $region32: #{uncertainty_module_forward.1} parent=11 // pred_fallthru
          _
        // Predicated region
        $region33: #{uncertainty_module_forward.1} parent=11 // pred_check
          %p285 = pneg %p171
        $region34: #{uncertainty_module_forward.1} parent=11 // pred_check_branch
          %287 = sbr.rel (%p285) target = $region36
        $region35: #{uncertainty_module_forward.1} parent=11 // pred_region
          _
        $region36: #{uncertainty_module_forward.1} parent=11 // pred_fallthru
          _
        // Predicated region
        $region37: #{uncertainty_module_forward.1} parent=11 // pred_check
          %p288 = pneg %p192
        $region38: #{uncertainty_module_forward.1} parent=11 // pred_check_branch
          %290 = sbr.rel (%p288) target = $region40
        $region39: #{uncertainty_module_forward.1} parent=11 // pred_region
          _
        $region40: #{uncertainty_module_forward.1} parent=11 // pred_fallthru
          _
      $region12: #{uncertainty_module_forward.1} parent=5 // pred_fallthru
        _
      %p291 = scmp.lt.s32.totalorder %s19, 2
      // Predicated region
      $region41: #{uncertainty_module_forward.1} parent=5 // pred_check
        %p292 = pneg %p291
      $region42: #{uncertainty_module_forward.1} parent=5 // pred_check_branch
        %294 = sbr.rel (%p292) target = $region44
      $region43: #{uncertainty_module_forward.1} parent=5 // pred_region
        // Predicated region
        $region45: #{uncertainty_module_forward.1} parent=43 // pred_check
          %p295 = pneg %p39
        $region46: #{uncertainty_module_forward.1} parent=43 // pred_check_branch
          %297 = sbr.rel (%p295) target = $region48
        $region47: #{uncertainty_module_forward.1} parent=43 // pred_region
          %s298 = sand.u32 %s29, 1
          %s299 = sand.u32 %s29, 1
          %s300 = smul.addr %s299, 8
          %s301 = scalar_lea.vmem [#allocation3], %s300
          %s302 = smul.addr %s19, 2
          %s303 = scalar_lea.vmem %s0, %s302
          // Predicated region
          $region49: #{uncertainty_module_forward.1} parent=47 // pred_check
            _
          $region50: #{uncertainty_module_forward.1} parent=47 // pred_check_branch
            %305 = sbr.rel (0) target = $region52
          $region51: #{uncertainty_module_forward.1} parent=47 // pred_region
            // Predicated region
            $region53: #{uncertainty_module_forward.1} parent=51 // pred_check
              _
            $region54: #{uncertainty_module_forward.1} parent=51 // pred_check_branch
              %307 = sbr.rel target = $region56
            $region55: #{uncertainty_module_forward.1} parent=51 // pred_region
              // Predicated region
              $region68: #{uncertainty_module_forward.1} parent=55 // pred_check
                _
              $region69: #{uncertainty_module_forward.1} parent=55 // pred_check_branch
                %329 = sbr.rel (0) target = $region71
              $region70: #{uncertainty_module_forward.1} parent=55 // pred_region
                loop: start=0, step=1, limit=1
                $region72: #{uncertainty_module_forward.1} parent=70 // loop_pre_header
                  _
                $region73: #{uncertainty_module_forward.1} parent=70 // loop_header
                  %s331 = sphi 0, %s335
                  %p332 = scmp.ge.s32.totalorder %s331, 1
                  %s336 = sphi %s303, %s303
                  %s337 = sphi %s301, %s301
                $region74: #{uncertainty_module_forward.1} parent=70 // loop_header_branch
                  %334 = sbr.rel (%p332) target = $region78
                $region75: #{uncertainty_module_forward.1} parent=70 // loop_body
                  _
                $region76: #{uncertainty_module_forward.1} parent=70 // loop_footer
                  %s335 = sadd.s32 1, %s331
                $region77: #{uncertainty_module_forward.1} parent=70 // loop_footer_branch
                  %330 = sbr.rel target = $region73
                $region78: #{uncertainty_module_forward.1} parent=70 // loop_exit
                  _
                %s339 = ssub.s32 4, 1
                loop: start=0, step=1, limit=1
                $region79: #{uncertainty_module_forward.1} parent=70 // loop_pre_header
                  _
                $region80: #{uncertainty_module_forward.1} parent=70 // loop_header
                  %s341 = sphi 0, %s345
                  %p342 = scmp.ge.s32.totalorder %s341, 1
                  %s346 = sphi %s303, %s303
                  %s347 = sphi %s301, %s301
                $region81: #{uncertainty_module_forward.1} parent=70 // loop_header_branch
                  %344 = sbr.rel (%p342) target = $region85
                $region82: #{uncertainty_module_forward.1} parent=70 // loop_body
                  %v348 = vld [vmem:[%s346] sm:%s339]
                  %349 = vst [vmem:[%s347] sm:%s339] %v348
                  %v350 = vld [vmem:[%s346 + $0x4] sm:%s339]
                  %351 = vst [vmem:[%s347 + $0x2] sm:%s339] %v350
                  %v352 = vld [vmem:[%s346 + $0x8] sm:%s339]
                  %353 = vst [vmem:[%s347 + $0x4] sm:%s339] %v352
                  %v354 = vld [vmem:[%s346 + $0xc] sm:%s339]
                  %355 = vst [vmem:[%s347 + $0x6] sm:%s339] %v354
                $region83: #{uncertainty_module_forward.1} parent=70 // loop_footer
                  %s345 = sadd.s32 1, %s341
                $region84: #{uncertainty_module_forward.1} parent=70 // loop_footer_branch
                  %340 = sbr.rel target = $region80
                $region85: #{uncertainty_module_forward.1} parent=70 // loop_exit
                  _
              $region71: #{uncertainty_module_forward.1} parent=55 // pred_fallthru
                _
            $region56: #{uncertainty_module_forward.1} parent=51 // pred_fallthru
              _
            // Predicated region
            $region57: #{uncertainty_module_forward.1} parent=51 // pred_check
              _
            $region58: #{uncertainty_module_forward.1} parent=51 // pred_check_branch
              %309 = sbr.rel (0) target = $region60
            $region59: #{uncertainty_module_forward.1} parent=51 // pred_region
              %s311 = ssub.s32 4, 1
              loop: start=0, step=1, limit=1
              $region61: #{uncertainty_module_forward.1} parent=59 // loop_pre_header
                _
              $region62: #{uncertainty_module_forward.1} parent=59 // loop_header
                %s313 = sphi 0, %s317
                %p314 = scmp.ge.s32.totalorder %s313, 1
                %s318 = sphi %s303, %s303
                %s319 = sphi %s301, %s301
              $region63: #{uncertainty_module_forward.1} parent=59 // loop_header_branch
                %316 = sbr.rel (%p314) target = $region67
              $region64: #{uncertainty_module_forward.1} parent=59 // loop_body
                %v320 = vld [vmem:[%s318] sm:%s311]
                %321 = vst [vmem:[%s319] sm:%s311] %v320
                %v322 = vld [vmem:[%s318 + $0x4] sm:%s311]
                %323 = vst [vmem:[%s319 + $0x2] sm:%s311] %v322
                %v324 = vld [vmem:[%s318 + $0x8] sm:%s311]
                %325 = vst [vmem:[%s319 + $0x4] sm:%s311] %v324
                %v326 = vld [vmem:[%s318 + $0xc] sm:%s311]
                %327 = vst [vmem:[%s319 + $0x6] sm:%s311] %v326
              $region65: #{uncertainty_module_forward.1} parent=59 // loop_footer
                %s317 = sadd.s32 1, %s313
              $region66: #{uncertainty_module_forward.1} parent=59 // loop_footer_branch
                %312 = sbr.rel target = $region62
              $region67: #{uncertainty_module_forward.1} parent=59 // loop_exit
                _
            $region60: #{uncertainty_module_forward.1} parent=51 // pred_fallthru
              _
          $region52: #{uncertainty_module_forward.1} parent=47 // pred_fallthru
            _
          %356 = vnop
        $region48: #{uncertainty_module_forward.1} parent=43 // pred_fallthru
          _
      $region44: #{uncertainty_module_forward.1} parent=5 // pred_fallthru
        _
      %p357 = scmp.le.s32.totalorder 1, %s19
      %p358 = scmp.lt.s32.totalorder %s19, 3
      %p359 = pnand %p357, %p358
      %p360 = pneg %p359
      // Predicated region
      $region86: #{uncertainty_module_forward.1} parent=5 // pred_check
        _
      $region87: #{uncertainty_module_forward.1} parent=5 // pred_check_branch
        %362 = sbr.rel (%p359) target = $region89
      $region88: #{uncertainty_module_forward.1} parent=5 // pred_region
        %s363 = ssub.s32 %s19, 1
        %s364 = sand.u32 %s32, 1
        %s365 = sand.u32 %s32, 1
        %s366 = smul.addr %s365, 8
        %s367 = scalar_lea.vmem [#allocation3], %s366
        // Predicated region
        $region90: #{uncertainty_module_forward.1} parent=88 // pred_check
          %p368 = pneg %p45
        $region91: #{uncertainty_module_forward.1} parent=88 // pred_check_branch
          %370 = sbr.rel (%p368) target = $region93
        $region92: #{uncertainty_module_forward.1} parent=88 // pred_region
          _
        $region93: #{uncertainty_module_forward.1} parent=88 // pred_fallthru
          _
        %s371 = sand.u32 %s32, 1
        %s372 = sand.u32 %s32, 1
        %s373 = smul.addr %s372, 8
        %s374 = scalar_lea.vmem [#allocation3], %s373
        %p375 = pneg %p45
        %p376 = pneg %p42
        %p377 = pneg %p66
        %p378 = pneg %p63
        %p379 = pneg %p87
        %p380 = pneg %p84
        %p381 = pneg %p108
        %p382 = pneg %p105
        %p383 = pneg %p129
        %p384 = pneg %p126
        %p385 = pneg %p150
        %p386 = pneg %p147
        %p387 = pneg %p171
        %p388 = pneg %p168
        %p389 = pneg %p192
        %p390 = pneg %p189
        %p391 = pneg %p213
        %p392 = pneg %p210
        %p393 = pneg %p234
        %p394 = pneg %p231
        %p395 = pneg %p255
        %p396 = pneg %p252
        %p398 = scmp.eq.s32.totalorder %s24, 0
        // Predicated region
        $region94: #{uncertainty_module_forward.1} parent=88 // pred_check
          %p399 = pneg %p398
        $region95: #{uncertainty_module_forward.1} parent=88 // pred_check_branch
          %401 = sbr.rel (%p399) target = $region97
        $region96: #{uncertainty_module_forward.1} parent=88 // pred_region
          %402 = vst [vmem:[#allocation2] sm:$0xff] 0.0
          %403 = vst [vmem:[#allocation2 + $0x8] sm:$0xff] 0.0
          %404 = vst [vmem:[#allocation2 + $0x10] sm:$0xff] 0.0
          %405 = vst [vmem:[#allocation2 + $0x18] sm:$0xff] 0.0
          %406 = vst [vmem:[#allocation2 + $0x20] sm:$0xff] 0.0
          %407 = vst [vmem:[#allocation2 + $0x28] sm:$0xff] 0.0
          %408 = vst [vmem:[#allocation2 + $0x30] sm:$0xff] 0.0
          %409 = vst [vmem:[#allocation2 + $0x38] sm:$0xff] 0.0
          %410 = vst [vmem:[#allocation2 + $0x40] sm:$0xff] 0.0
          %411 = vst [vmem:[#allocation2 + $0x48] sm:$0xff] 0.0
          %412 = vst [vmem:[#allocation2 + $0x50] sm:$0xff] 0.0
          %413 = vst [vmem:[#allocation2 + $0x58] sm:$0xff] 0.0
          %414 = vst [vmem:[#allocation2 + $0x60] sm:$0xff] 0.0
          %415 = vst [vmem:[#allocation2 + $0x68] sm:$0xff] 0.0
          %416 = vst [vmem:[#allocation2 + $0x70] sm:$0xff] 0.0
          %417 = vst [vmem:[#allocation2 + $0x78] sm:$0xff] 0.0
        $region97: #{uncertainty_module_forward.1} parent=88 // pred_fallthru
          _
        %v418 = vld [vmem:[%s1] sm:$0xf]
        %v419 = vld [vmem:[%s1 + $0x4] sm:$0xf]
        %v420 = vld [vmem:[%s1 + $0x8] sm:$0xf]
        %v421 = vld [vmem:[%s1 + $0xc] sm:$0xf]
        %v422 = vld [vmem:[%s1 + $0x10] sm:$0xf]
        %v423 = vld [vmem:[%s1 + $0x14] sm:$0xf]
        %v424 = vld [vmem:[%s1 + $0x18] sm:$0xf]
        %v425 = vld [vmem:[%s1 + $0x1c] sm:$0xf]
        %v426 = vld [vmem:[%s1 + $0x20] sm:$0xf]
        %v427 = vld [vmem:[%s1 + $0x24] sm:$0xf]
        %v428 = vld [vmem:[%s1 + $0x28] sm:$0xf]
        %v429 = vld [vmem:[%s1 + $0x2c] sm:$0xf]
        %v430 = vld [vmem:[%s1 + $0x30] sm:$0xf]
        %v431 = vld [vmem:[%s1 + $0x34] sm:$0xf]
        %v432 = vld [vmem:[%s1 + $0x38] sm:$0xf]
        %v433 = vld [vmem:[%s1 + $0x3c] sm:$0xf]
        %v434 = vld [vmem:[%s367] sm:$0x3]
        %v435 = vld [vmem:[%s367 + $0x2] sm:$0x3]
        %v436 = vld [vmem:[%s367 + $0x4] sm:$0x3]
        %v437 = vld [vmem:[%s367 + $0x6] sm:$0x3]
        %v438 = vld [vmem:[%s2] sm:$0xff]
        %v439 = vld [vmem:[%s2 + $0x8] sm:$0xff]
        %v440 = vld [vmem:[%s2 + $0x10] sm:$0xff]
        %v441 = vld [vmem:[%s2 + $0x18] sm:$0xff]
        %443 = vset.pattern.permute.xlu0 0
        %444 = vperm.xlu0 %443, %v438
        %v445 = vpop.permute.xlu0 %444
        %448 = vset.pattern.permute.xlu0 0
        %449 = vperm.xlu0 %448, %v439
        %v450 = vpop.permute.xlu0 %449
        %453 = vset.pattern.permute.xlu0 0
        %454 = vperm.xlu0 %453, %v440
        %v455 = vpop.permute.xlu0 %454
        %458 = vset.pattern.permute.xlu0 0
        %459 = vperm.xlu0 %458, %v441
        %v460 = vpop.permute.xlu0 %459
        %v466 = vunpack.c.l.b16 %v418
        %v467 = vunpack.c.l.b16 %v419
        %v468 = vunpack.c.l.b16 %v420
        %v469 = vunpack.c.l.b16 %v421
        %v470 = vpack.c.b16 %v467, %v466
        %v471 = vpack.c.b16 %v469, %v468
        %vm472 = vcmask 31744
        %v474 = vsel %vm472, %v470, 0
        %v477 = vsel %vm472, %v471, 0
        %vm479 = vcmask 1041408
        %v481 = vsel %vm479, %v434, 0
        %483 = vmatprep.subr.bf16.mxu0 0
        %484 = vmatpush1.bf16.msra.mxu0 0
        %485 = vmatprep.subr.bf16.mxu0 0
        %486 = vmatpush1.bf16.msra.mxu0 0
        %487 = vmatprep.subr.bf16.mxu0 0
        %488 = vmatpush1.bf16.msra.mxu0 0
        %489 = vmatprep.subr.bf16.mxu0 0
        %490 = vmatpush1.bf16.msra.mxu0 0
        %491 = vmatprep.subr.bf16.mxu0 0
        %492 = vmatpush1.bf16.msra.mxu0 0
        %493 = vmatprep.subr.bf16.mxu0 0
        %494 = vmatpush1.bf16.msra.mxu0 0
        %495 = vmatprep.subr.bf16.mxu0 0
        %496 = vmatpush1.bf16.msra.mxu0 0
        %497 = vmatprep.subr.bf16.mxu0 0
        %498 = vmatpush1.bf16.msra.mxu0 %v481
        %499 = vmatprep.subr.bf16.mxu0 0
        %500 = vmatpush2.bf16.msra.mxu0 0
        %501 = vmatprep.subr.bf16.mxu0 0
        %502 = vmatpush2.bf16.msra.mxu0 0
        %503 = vmatprep.subr.bf16.mxu0 0
        %504 = vmatpush2.bf16.msra.mxu0 0
        %505 = vmatprep.subr.bf16.mxu0 0
        %506 = vmatpush2.bf16.msra.mxu0 0
        %507 = vmatprep.subr.bf16.mxu0 0
        %508 = vmatpush2.bf16.msra.mxu0 0
        %509 = vmatprep.subr.bf16.mxu0 0
        %510 = vmatpush2.bf16.msra.mxu0 0
        %511 = vmatprep.subr.bf16.mxu0 0
        %512 = vmatpush2.bf16.msra.mxu0 0
        %513 = vmatprep.subr.bf16.mxu0 0
        %514 = vmatpush2.bf16.msra.mxu0 0
        %515 = vmatprep.mubr.bf16.mxu0 0
        %516 = vmatmul.mubr.bf16.gmra.mxu0 %v474
        %v517 = vpop.f32.mrf.mxu0
        %v518 = vadd.f32 %v445, %v517
        %v519 = vpop.f32.mrf.mxu0
        %v520 = vpop.f32.mrf.mxu0
        %v521 = vadd.f32 %v450, %v520
        %v522 = vpop.f32.mrf.mxu0
        %523 = vmatprep.mubr.bf16.mxu0 0
        %524 = vmatmul.mubr.bf16.gmra.mxu0 %v477
        %v525 = vpop.f32.mrf.mxu0
        %v526 = vadd.f32 %v455, %v525
        %v527 = vpop.f32.mrf.mxu0
        %v528 = vpop.f32.mrf.mxu0
        %v529 = vadd.f32 %v460, %v528
        %v530 = vpop.f32.mrf.mxu0
        %531 = vdwg.mxu0
        %v536 = vunpack.c.l.b16 %v422
        %v537 = vunpack.c.l.b16 %v423
        %v538 = vunpack.c.l.b16 %v424
        %v539 = vunpack.c.l.b16 %v425
        %v540 = vpack.c.b16 %v537, %v536
        %v541 = vpack.c.b16 %v539, %v538
        %v543 = vsel %vm472, %v540, 0
        %v546 = vsel %vm472, %v541, 0
        %v549 = vsel %vm479, %v435, 0
        %551 = vmatprep.subr.bf16.mxu0 0
        %552 = vmatpush1.bf16.msra.mxu0 0
        %553 = vmatprep.subr.bf16.mxu0 0
        %554 = vmatpush1.bf16.msra.mxu0 0
        %555 = vmatprep.subr.bf16.mxu0 0
        %556 = vmatpush1.bf16.msra.mxu0 0
        %557 = vmatprep.subr.bf16.mxu0 0
        %558 = vmatpush1.bf16.msra.mxu0 0
        %559 = vmatprep.subr.bf16.mxu0 0
        %560 = vmatpush1.bf16.msra.mxu0 0
        %561 = vmatprep.subr.bf16.mxu0 0
        %562 = vmatpush1.bf16.msra.mxu0 0
        %563 = vmatprep.subr.bf16.mxu0 0
        %564 = vmatpush1.bf16.msra.mxu0 0
        %565 = vmatprep.subr.bf16.mxu0 0
        %566 = vmatpush1.bf16.msra.mxu0 %v549
        %567 = vmatprep.subr.bf16.mxu0 0
        %568 = vmatpush2.bf16.msra.mxu0 0
        %569 = vmatprep.subr.bf16.mxu0 0
        %570 = vmatpush2.bf16.msra.mxu0 0
        %571 = vmatprep.subr.bf16.mxu0 0
        %572 = vmatpush2.bf16.msra.mxu0 0
        %573 = vmatprep.subr.bf16.mxu0 0
        %574 = vmatpush2.bf16.msra.mxu0 0
        %575 = vmatprep.subr.bf16.mxu0 0
        %576 = vmatpush2.bf16.msra.mxu0 0
        %577 = vmatprep.subr.bf16.mxu0 0
        %578 = vmatpush2.bf16.msra.mxu0 0
        %579 = vmatprep.subr.bf16.mxu0 0
        %580 = vmatpush2.bf16.msra.mxu0 0
        %581 = vmatprep.subr.bf16.mxu0 0
        %582 = vmatpush2.bf16.msra.mxu0 0
        %583 = vmatprep.mubr.bf16.mxu0 0
        %584 = vmatmul.mubr.bf16.gmra.mxu0 %v543
        %v585 = vpop.f32.mrf.mxu0
        %v586 = vadd.f32 %v445, %v585
        %v587 = vpop.f32.mrf.mxu0
        %v588 = vpop.f32.mrf.mxu0
        %v589 = vadd.f32 %v450, %v588
        %v590 = vpop.f32.mrf.mxu0
        %591 = vmatprep.mubr.bf16.mxu0 0
        %592 = vmatmul.mubr.bf16.gmra.mxu0 %v546
        %v593 = vpop.f32.mrf.mxu0
        %v594 = vadd.f32 %v455, %v593
        %v595 = vpop.f32.mrf.mxu0
        %v596 = vpop.f32.mrf.mxu0
        %v597 = vadd.f32 %v460, %v596
        %v598 = vpop.f32.mrf.mxu0
        %599 = vdwg.mxu0
        %v604 = vunpack.c.l.b16 %v426
        %v605 = vunpack.c.l.b16 %v427
        %v606 = vunpack.c.l.b16 %v428
        %v607 = vunpack.c.l.b16 %v429
        %v608 = vpack.c.b16 %v605, %v604
        %v609 = vpack.c.b16 %v607, %v606
        %v611 = vsel %vm472, %v608, 0
        %v614 = vsel %vm472, %v609, 0
        %v617 = vsel %vm479, %v436, 0
        %619 = vmatprep.subr.bf16.mxu0 0
        %620 = vmatpush1.bf16.msra.mxu0 0
        %621 = vmatprep.subr.bf16.mxu0 0
        %622 = vmatpush1.bf16.msra.mxu0 0
        %623 = vmatprep.subr.bf16.mxu0 0
        %624 = vmatpush1.bf16.msra.mxu0 0
        %625 = vmatprep.subr.bf16.mxu0 0
        %626 = vmatpush1.bf16.msra.mxu0 0
        %627 = vmatprep.subr.bf16.mxu0 0
        %628 = vmatpush1.bf16.msra.mxu0 0
        %629 = vmatprep.subr.bf16.mxu0 0
        %630 = vmatpush1.bf16.msra.mxu0 0
        %631 = vmatprep.subr.bf16.mxu0 0
        %632 = vmatpush1.bf16.msra.mxu0 0
        %633 = vmatprep.subr.bf16.mxu0 0
        %634 = vmatpush1.bf16.msra.mxu0 %v617
        %635 = vmatprep.subr.bf16.mxu0 0
        %636 = vmatpush2.bf16.msra.mxu0 0
        %637 = vmatprep.subr.bf16.mxu0 0
        %638 = vmatpush2.bf16.msra.mxu0 0
        %639 = vmatprep.subr.bf16.mxu0 0
        %640 = vmatpush2.bf16.msra.mxu0 0
        %641 = vmatprep.subr.bf16.mxu0 0
        %642 = vmatpush2.bf16.msra.mxu0 0
        %643 = vmatprep.subr.bf16.mxu0 0
        %644 = vmatpush2.bf16.msra.mxu0 0
        %645 = vmatprep.subr.bf16.mxu0 0
        %646 = vmatpush2.bf16.msra.mxu0 0
        %647 = vmatprep.subr.bf16.mxu0 0
        %648 = vmatpush2.bf16.msra.mxu0 0
        %649 = vmatprep.subr.bf16.mxu0 0
        %650 = vmatpush2.bf16.msra.mxu0 0
        %651 = vmatprep.mubr.bf16.mxu0 0
        %652 = vmatmul.mubr.bf16.gmra.mxu0 %v611
        %v653 = vpop.f32.mrf.mxu0
        %v654 = vadd.f32 %v445, %v653
        %v655 = vpop.f32.mrf.mxu0
        %v656 = vpop.f32.mrf.mxu0
        %v657 = vadd.f32 %v450, %v656
        %v658 = vpop.f32.mrf.mxu0
        %659 = vmatprep.mubr.bf16.mxu0 0
        %660 = vmatmul.mubr.bf16.gmra.mxu0 %v614
        %v661 = vpop.f32.mrf.mxu0
        %v662 = vadd.f32 %v455, %v661
        %v663 = vpop.f32.mrf.mxu0
        %v664 = vpop.f32.mrf.mxu0
        %v665 = vadd.f32 %v460, %v664
        %v666 = vpop.f32.mrf.mxu0
        %667 = vdwg.mxu0
        %v672 = vunpack.c.l.b16 %v430
        %v673 = vunpack.c.l.b16 %v431
        %v674 = vunpack.c.l.b16 %v432
        %v675 = vunpack.c.l.b16 %v433
        %v676 = vpack.c.b16 %v673, %v672
        %v677 = vpack.c.b16 %v675, %v674
        %v679 = vsel %vm472, %v676, 0
        %v682 = vsel %vm472, %v677, 0
        %v685 = vsel %vm479, %v437, 0
        %687 = vmatprep.subr.bf16.mxu0 0
        %688 = vmatpush1.bf16.msra.mxu0 0
        %689 = vmatprep.subr.bf16.mxu0 0
        %690 = vmatpush1.bf16.msra.mxu0 0
        %691 = vmatprep.subr.bf16.mxu0 0
        %692 = vmatpush1.bf16.msra.mxu0 0
        %693 = vmatprep.subr.bf16.mxu0 0
        %694 = vmatpush1.bf16.msra.mxu0 0
        %695 = vmatprep.subr.bf16.mxu0 0
        %696 = vmatpush1.bf16.msra.mxu0 0
        %697 = vmatprep.subr.bf16.mxu0 0
        %698 = vmatpush1.bf16.msra.mxu0 0
        %699 = vmatprep.subr.bf16.mxu0 0
        %700 = vmatpush1.bf16.msra.mxu0 0
        %701 = vmatprep.subr.bf16.mxu0 0
        %702 = vmatpush1.bf16.msra.mxu0 %v685
        %703 = vmatprep.subr.bf16.mxu0 0
        %704 = vmatpush2.bf16.msra.mxu0 0
        %705 = vmatprep.subr.bf16.mxu0 0
        %706 = vmatpush2.bf16.msra.mxu0 0
        %707 = vmatprep.subr.bf16.mxu0 0
        %708 = vmatpush2.bf16.msra.mxu0 0
        %709 = vmatprep.subr.bf16.mxu0 0
        %710 = vmatpush2.bf16.msra.mxu0 0
        %711 = vmatprep.subr.bf16.mxu0 0
        %712 = vmatpush2.bf16.msra.mxu0 0
        %713 = vmatprep.subr.bf16.mxu0 0
        %714 = vmatpush2.bf16.msra.mxu0 0
        %715 = vmatprep.subr.bf16.mxu0 0
        %716 = vmatpush2.bf16.msra.mxu0 0
        %717 = vmatprep.subr.bf16.mxu0 0
        %718 = vmatpush2.bf16.msra.mxu0 0
        %719 = vmatprep.mubr.bf16.mxu0 0
        %720 = vmatmul.mubr.bf16.gmra.mxu0 %v679
        %v721 = vpop.f32.mrf.mxu0
        %v722 = vadd.f32 %v445, %v721
        %v723 = vpop.f32.mrf.mxu0
        %v724 = vpop.f32.mrf.mxu0
        %v725 = vadd.f32 %v450, %v724
        %v726 = vpop.f32.mrf.mxu0
        %727 = vmatprep.mubr.bf16.mxu0 0
        %728 = vmatmul.mubr.bf16.gmra.mxu0 %v682
        %v729 = vpop.f32.mrf.mxu0
        %v730 = vadd.f32 %v455, %v729
        %v731 = vpop.f32.mrf.mxu0
        %v732 = vpop.f32.mrf.mxu0
        %v733 = vadd.f32 %v460, %v732
        %v734 = vpop.f32.mrf.mxu0
        %735 = vdwg.mxu0
        %v736 = vmax.f32 %v518, 0.0
        %v737 = vmax.f32 %v521, 0.0
        %v738 = vmax.f32 %v526, 0.0
        %v739 = vmax.f32 %v529, 0.0
        %v740 = vmax.f32 %v586, 0.0
        %v741 = vmax.f32 %v589, 0.0
        %v742 = vmax.f32 %v594, 0.0
        %v743 = vmax.f32 %v597, 0.0
        %v744 = vmax.f32 %v654, 0.0
        %v745 = vmax.f32 %v657, 0.0
        %v746 = vmax.f32 %v662, 0.0
        %v747 = vmax.f32 %v665, 0.0
        %v748 = vmax.f32 %v722, 0.0
        %v749 = vmax.f32 %v725, 0.0
        %v750 = vmax.f32 %v730, 0.0
        %v751 = vmax.f32 %v733, 0.0
        %v752 = vld [vmem:[#allocation2] sm:$0xff]
        %v753 = vld [vmem:[#allocation2 + $0x8] sm:$0xff]
        %v754 = vld [vmem:[#allocation2 + $0x10] sm:$0xff]
        %v755 = vld [vmem:[#allocation2 + $0x18] sm:$0xff]
        %v756 = vld [vmem:[#allocation2 + $0x20] sm:$0xff]
        %v757 = vld [vmem:[#allocation2 + $0x28] sm:$0xff]
        %v758 = vld [vmem:[#allocation2 + $0x30] sm:$0xff]
        %v759 = vld [vmem:[#allocation2 + $0x38] sm:$0xff]
        %v760 = vld [vmem:[#allocation2 + $0x40] sm:$0xff]
        %v761 = vld [vmem:[#allocation2 + $0x48] sm:$0xff]
        %v762 = vld [vmem:[#allocation2 + $0x50] sm:$0xff]
        %v763 = vld [vmem:[#allocation2 + $0x58] sm:$0xff]
        %v764 = vld [vmem:[#allocation2 + $0x60] sm:$0xff]
        %v765 = vld [vmem:[#allocation2 + $0x68] sm:$0xff]
        %v766 = vld [vmem:[#allocation2 + $0x70] sm:$0xff]
        %v767 = vld [vmem:[#allocation2 + $0x78] sm:$0xff]
        %v768 = vadd.f32 %v752, %v736
        %v769 = vadd.f32 %v753, %v737
        %v770 = vadd.f32 %v754, %v738
        %v771 = vadd.f32 %v755, %v739
        %v772 = vadd.f32 %v756, %v740
        %v773 = vadd.f32 %v757, %v741
        %v774 = vadd.f32 %v758, %v742
        %v775 = vadd.f32 %v759, %v743
        %v776 = vadd.f32 %v760, %v744
        %v777 = vadd.f32 %v761, %v745
        %v778 = vadd.f32 %v762, %v746
        %v779 = vadd.f32 %v763, %v747
        %v780 = vadd.f32 %v764, %v748
        %v781 = vadd.f32 %v765, %v749
        %v782 = vadd.f32 %v766, %v750
        %v783 = vadd.f32 %v767, %v751
        %784 = vst [vmem:[#allocation2] sm:$0xff] %v768
        %785 = vst [vmem:[#allocation2 + $0x8] sm:$0xff] %v769
        %786 = vst [vmem:[#allocation2 + $0x10] sm:$0xff] %v770
        %787 = vst [vmem:[#allocation2 + $0x18] sm:$0xff] %v771
        %788 = vst [vmem:[#allocation2 + $0x20] sm:$0xff] %v772
        %789 = vst [vmem:[#allocation2 + $0x28] sm:$0xff] %v773
        %790 = vst [vmem:[#allocation2 + $0x30] sm:$0xff] %v774
        %791 = vst [vmem:[#allocation2 + $0x38] sm:$0xff] %v775
        %792 = vst [vmem:[#allocation2 + $0x40] sm:$0xff] %v776
        %793 = vst [vmem:[#allocation2 + $0x48] sm:$0xff] %v777
        %794 = vst [vmem:[#allocation2 + $0x50] sm:$0xff] %v778
        %795 = vst [vmem:[#allocation2 + $0x58] sm:$0xff] %v779
        %796 = vst [vmem:[#allocation2 + $0x60] sm:$0xff] %v780
        %797 = vst [vmem:[#allocation2 + $0x68] sm:$0xff] %v781
        %798 = vst [vmem:[#allocation2 + $0x70] sm:$0xff] %v782
        %799 = vst [vmem:[#allocation2 + $0x78] sm:$0xff] %v783
        %p800 = scmp.eq.s32.totalorder %s24, 1
        // Predicated region
        $region98: #{uncertainty_module_forward.1} parent=88 // pred_check
          %p801 = pneg %p800
        $region99: #{uncertainty_module_forward.1} parent=88 // pred_check_branch
          %803 = sbr.rel (%p801) target = $region101
        $region100: #{uncertainty_module_forward.1} parent=88 // pred_region
          %v804 = vld [vmem:[#allocation2] sm:$0xff]
          %v805 = vld [vmem:[#allocation2 + $0x8] sm:$0xff]
          %v806 = vld [vmem:[#allocation2 + $0x10] sm:$0xff]
          %v807 = vld [vmem:[#allocation2 + $0x18] sm:$0xff]
          %v808 = vld [vmem:[#allocation2 + $0x20] sm:$0xff]
          %v809 = vld [vmem:[#allocation2 + $0x28] sm:$0xff]
          %v810 = vld [vmem:[#allocation2 + $0x30] sm:$0xff]
          %v811 = vld [vmem:[#allocation2 + $0x38] sm:$0xff]
          %v812 = vld [vmem:[#allocation2 + $0x40] sm:$0xff]
          %v813 = vld [vmem:[#allocation2 + $0x48] sm:$0xff]
          %v814 = vld [vmem:[#allocation2 + $0x50] sm:$0xff]
          %v815 = vld [vmem:[#allocation2 + $0x58] sm:$0xff]
          %v816 = vld [vmem:[#allocation2 + $0x60] sm:$0xff]
          %v817 = vld [vmem:[#allocation2 + $0x68] sm:$0xff]
          %v818 = vld [vmem:[#allocation2 + $0x70] sm:$0xff]
          %v819 = vld [vmem:[#allocation2 + $0x78] sm:$0xff]
          %820 = vadd.xlane.f32.xlu0 %v804
          %v821 = vpop.xlane.xlu0 %820
          %822 = vadd.xlane.f32.xlu0 %v805
          %v823 = vpop.xlane.xlu0 %822
          %824 = vadd.xlane.f32.xlu0 %v806
          %v825 = vpop.xlane.xlu0 %824
          %826 = vadd.xlane.f32.xlu0 %v807
          %v827 = vpop.xlane.xlu0 %826
          %828 = vadd.xlane.f32.xlu0 %v808
          %v829 = vpop.xlane.xlu0 %828
          %830 = vadd.xlane.f32.xlu0 %v809
          %v831 = vpop.xlane.xlu0 %830
          %832 = vadd.xlane.f32.xlu0 %v810
          %v833 = vpop.xlane.xlu0 %832
          %834 = vadd.xlane.f32.xlu0 %v811
          %v835 = vpop.xlane.xlu0 %834
          %836 = vadd.xlane.f32.xlu0 %v812
          %v837 = vpop.xlane.xlu0 %836
          %838 = vadd.xlane.f32.xlu0 %v813
          %v839 = vpop.xlane.xlu0 %838
          %840 = vadd.xlane.f32.xlu0 %v814
          %v841 = vpop.xlane.xlu0 %840
          %842 = vadd.xlane.f32.xlu0 %v815
          %v843 = vpop.xlane.xlu0 %842
          %844 = vadd.xlane.f32.xlu0 %v816
          %v845 = vpop.xlane.xlu0 %844
          %846 = vadd.xlane.f32.xlu0 %v817
          %v847 = vpop.xlane.xlu0 %846
          %848 = vadd.xlane.f32.xlu0 %v818
          %v849 = vpop.xlane.xlu0 %848
          %850 = vadd.xlane.f32.xlu0 %v819
          %v851 = vpop.xlane.xlu0 %850
          %v852 = vmul.f32 %v821, 0.00390625
          %v853 = vmul.f32 %v823, 0.00390625
          %v854 = vmul.f32 %v825, 0.00390625
          %v855 = vmul.f32 %v827, 0.00390625
          %v856 = vmul.f32 %v829, 0.00390625
          %v857 = vmul.f32 %v831, 0.00390625
          %v858 = vmul.f32 %v833, 0.00390625
          %v859 = vmul.f32 %v835, 0.00390625
          %v860 = vmul.f32 %v837, 0.00390625
          %v861 = vmul.f32 %v839, 0.00390625
          %v862 = vmul.f32 %v841, 0.00390625
          %v863 = vmul.f32 %v843, 0.00390625
          %v864 = vmul.f32 %v845, 0.00390625
          %v865 = vmul.f32 %v847, 0.00390625
          %v866 = vmul.f32 %v849, 0.00390625
          %v867 = vmul.f32 %v851, 0.00390625
          %v868 = vld [vmem:[%s3] sm:$0x1]
          %v870 = vlaneseq
          %v871 = vshrl.u32 %v870, 7
          %v872 = vsub.s32 0, %v871
          %v873 = vrot.slane %v868, %v872
          %875 = vbcast.lane.b32.xlu0 %v873, 256
          %v876 = vpop.permute.xlu0 %875
          %s878 = sor.u32 256, 8
          %879 = vbcast.lane.b32.xlu0 %v873, %s878
          %v880 = vpop.permute.xlu0 %879
          %s882 = sor.u32 256, 16
          %883 = vbcast.lane.b32.xlu0 %v873, %s882
          %v884 = vpop.permute.xlu0 %883
          %s886 = sor.u32 256, 24
          %887 = vbcast.lane.b32.xlu0 %v873, %s886
          %v888 = vpop.permute.xlu0 %887
          %v893 = vsub.f32 %v852, %v876
          %v894 = vsub.f32 %v853, %v880
          %v895 = vsub.f32 %v854, %v884
          %v896 = vsub.f32 %v855, %v888
          %v897 = vsub.f32 %v856, %v876
          %v898 = vsub.f32 %v857, %v880
          %v899 = vsub.f32 %v858, %v884
          %v900 = vsub.f32 %v859, %v888
          %v901 = vsub.f32 %v860, %v876
          %v902 = vsub.f32 %v861, %v880
          %v903 = vsub.f32 %v862, %v884
          %v904 = vsub.f32 %v863, %v888
          %v905 = vsub.f32 %v864, %v876
          %v906 = vsub.f32 %v865, %v880
          %v907 = vsub.f32 %v866, %v884
          %v908 = vsub.f32 %v867, %v888
          %v909 = vld [vmem:[%s6] sm:$0xff]
          %v910 = vld [vmem:[%s6 + $0x8] sm:$0x1]
          %v911 = vld [vmem:[%s4] sm:$0xff]
          %v912 = vld [vmem:[%s4 + $0x8] sm:$0xff]
          %v913 = vld [vmem:[%s4 + $0x10] sm:$0xff]
          %v914 = vld [vmem:[%s4 + $0x18] sm:$0xff]
          %v915 = vld [vmem:[%s4 + $0x20] sm:$0xff]
          %v916 = vld [vmem:[%s4 + $0x28] sm:$0xff]
          %v917 = vld [vmem:[%s4 + $0x30] sm:$0xff]
          %v918 = vld [vmem:[%s4 + $0x38] sm:$0xff]
          %935 = vset.pattern.permute.xlu0 0
          %936 = vperm.xlu0 %935, %v893
          %v937 = vpop.permute.xlu0 %936
          %938 = vset.pattern.permute.xlu0 0
          %939 = vperm.xlu0 %938, %v894
          %v940 = vpop.permute.xlu0 %939
          %941 = vset.pattern.permute.xlu0 0
          %942 = vperm.xlu0 %941, %v895
          %v943 = vpop.permute.xlu0 %942
          %944 = vset.pattern.permute.xlu0 0
          %945 = vperm.xlu0 %944, %v896
          %v946 = vpop.permute.xlu0 %945
          %947 = vset.pattern.permute.xlu0 0
          %948 = vperm.xlu0 %947, %v897
          %v949 = vpop.permute.xlu0 %948
          %950 = vset.pattern.permute.xlu0 0
          %951 = vperm.xlu0 %950, %v898
          %v952 = vpop.permute.xlu0 %951
          %953 = vset.pattern.permute.xlu0 0
          %954 = vperm.xlu0 %953, %v899
          %v955 = vpop.permute.xlu0 %954
          %956 = vset.pattern.permute.xlu0 0
          %957 = vperm.xlu0 %956, %v900
          %v958 = vpop.permute.xlu0 %957
          %959 = vset.pattern.permute.xlu0 0
          %960 = vperm.xlu0 %959, %v901
          %v961 = vpop.permute.xlu0 %960
          %962 = vset.pattern.permute.xlu0 0
          %963 = vperm.xlu0 %962, %v902
          %v964 = vpop.permute.xlu0 %963
          %965 = vset.pattern.permute.xlu0 0
          %966 = vperm.xlu0 %965, %v903
          %v967 = vpop.permute.xlu0 %966
          %968 = vset.pattern.permute.xlu0 0
          %969 = vperm.xlu0 %968, %v904
          %v970 = vpop.permute.xlu0 %969
          %971 = vset.pattern.permute.xlu0 0
          %972 = vperm.xlu0 %971, %v905
          %v973 = vpop.permute.xlu0 %972
          %974 = vset.pattern.permute.xlu0 0
          %975 = vperm.xlu0 %974, %v906
          %v976 = vpop.permute.xlu0 %975
          %977 = vset.pattern.permute.xlu0 0
          %978 = vperm.xlu0 %977, %v907
          %v979 = vpop.permute.xlu0 %978
          %980 = vset.pattern.permute.xlu0 0
          %981 = vperm.xlu0 %980, %v908
          %v982 = vpop.permute.xlu0 %981
          %v983 = vlaneseq
          %v984 = vand.u32 %v983, 127
          %v985 = vlaneseq
          %v986 = vshrl.u32 %v985, 7
          %v987 = vsub.s32 %v984, %v986
          %v988 = vrot.slane %v937, %v987
          %v989 = vadd.s32 %v984, 4294967288
          %v990 = vlaneseq
          %v991 = vshrl.u32 %v990, 7
          %v992 = vsub.s32 %v989, %v991
          %v993 = vrot.slane %v940, %v992
          %vm994 = vcmask 130112
          %v995 = vsel %vm994, %v993, %v988
          %v996 = vadd.s32 %v984, 4294967280
          %v997 = vlaneseq
          %v998 = vshrl.u32 %v997, 7
          %v999 = vsub.s32 %v996, %v998
          %v1000 = vrot.slane %v943, %v999
          %vm1001 = vcmask 195712
          %v1002 = vsel %vm1001, %v1000, %v995
          %v1003 = vadd.s32 %v984, 4294967272
          %v1004 = vlaneseq
          %v1005 = vshrl.u32 %v1004, 7
          %v1006 = vsub.s32 %v1003, %v1005
          %v1007 = vrot.slane %v946, %v1006
          %vm1008 = vcmask 261312
          %v1009 = vsel %vm1008, %v1007, %v1002
          %v1010 = vlaneseq
          %v1011 = vshrl.u32 %v1010, 7
          %v1012 = vsub.s32 %v984, %v1011
          %v1013 = vrot.slane %v949, %v1012
          %v1014 = vlaneseq
          %v1015 = vshrl.u32 %v1014, 7
          %v1016 = vsub.s32 %v989, %v1015
          %v1017 = vrot.slane %v952, %v1016
          %v1018 = vsel %vm994, %v1017, %v1013
          %v1019 = vlaneseq
          %v1020 = vshrl.u32 %v1019, 7
          %v1021 = vsub.s32 %v996, %v1020
          %v1022 = vrot.slane %v955, %v1021
          %v1023 = vsel %vm1001, %v1022, %v1018
          %v1024 = vlaneseq
          %v1025 = vshrl.u32 %v1024, 7
          %v1026 = vsub.s32 %v1003, %v1025
          %v1027 = vrot.slane %v958, %v1026
          %v1028 = vsel %vm1008, %v1027, %v1023
          %v1029 = vlaneseq
          %v1030 = vshrl.u32 %v1029, 7
          %v1031 = vsub.s32 %v984, %v1030
          %v1032 = vrot.slane %v961, %v1031
          %v1033 = vlaneseq
          %v1034 = vshrl.u32 %v1033, 7
          %v1035 = vsub.s32 %v989, %v1034
          %v1036 = vrot.slane %v964, %v1035
          %v1037 = vsel %vm994, %v1036, %v1032
          %v1038 = vlaneseq
          %v1039 = vshrl.u32 %v1038, 7
          %v1040 = vsub.s32 %v996, %v1039
          %v1041 = vrot.slane %v967, %v1040
          %v1042 = vsel %vm1001, %v1041, %v1037
          %v1043 = vlaneseq
          %v1044 = vshrl.u32 %v1043, 7
          %v1045 = vsub.s32 %v1003, %v1044
          %v1046 = vrot.slane %v970, %v1045
          %v1047 = vsel %vm1008, %v1046, %v1042
          %v1048 = vlaneseq
          %v1049 = vshrl.u32 %v1048, 7
          %v1050 = vsub.s32 %v984, %v1049
          %v1051 = vrot.slane %v973, %v1050
          %v1052 = vlaneseq
          %v1053 = vshrl.u32 %v1052, 7
          %v1054 = vsub.s32 %v989, %v1053
          %v1055 = vrot.slane %v976, %v1054
          %v1056 = vsel %vm994, %v1055, %v1051
          %v1057 = vlaneseq
          %v1058 = vshrl.u32 %v1057, 7
          %v1059 = vsub.s32 %v996, %v1058
          %v1060 = vrot.slane %v979, %v1059
          %v1061 = vsel %vm1001, %v1060, %v1056
          %v1062 = vlaneseq
          %v1063 = vshrl.u32 %v1062, 7
          %v1064 = vsub.s32 %v1003, %v1063
          %v1065 = vrot.slane %v982, %v1064
          %v1066 = vsel %vm1008, %v1065, %v1061
          %vm1067 = vcmask 1041409
          %v1068 = vsel %vm1067, %v1028, %v1009
          %vm1069 = vcmask 1042434
          %v1070 = vsel %vm1069, %v1047, %v1068
          %vm1071 = vcmask 1043459
          %v1072 = vsel %vm1071, %v1066, %v1070
          %vm1073 = vcmask 261120
          %v1074 = vsel %vm1073, %v1072, 0
          %1076 = vmatprep.subr.mxu0 0.0
          %1077 = vmatpush1.msra.mxu0 0.0
          %1078 = vmatprep.subr.mxu0 0.0
          %1079 = vmatpush1.msra.mxu0 0.0
          %1080 = vmatprep.subr.mxu0 0.0
          %1081 = vmatpush1.msra.mxu0 0.0
          %1082 = vmatprep.subr.mxu0 0.0
          %1083 = vmatpush1.msra.mxu0 0.0
          %1084 = vmatprep.subr.mxu0 0.0
          %1085 = vmatpush1.msra.mxu0 0.0
          %1086 = vmatprep.subr.mxu0 0.0
          %1087 = vmatpush1.msra.mxu0 0.0
          %1088 = vmatprep.subr.mxu0 0.0
          %1089 = vmatpush1.msra.mxu0 0.0
          %1090 = vmatprep.subr.mxu0 0.0
          %1091 = vmatpush1.msra.mxu0 0.0
          %1092 = vmatprep.subr.mxu0 0.0
          %1093 = vmatpush1.msra.mxu0 0.0
          %1094 = vmatprep.subr.mxu0 0.0
          %1095 = vmatpush1.msra.mxu0 0.0
          %1096 = vmatprep.subr.mxu0 0.0
          %1097 = vmatpush1.msra.mxu0 0.0
          %1098 = vmatprep.subr.mxu0 0.0
          %1099 = vmatpush1.msra.mxu0 0.0
          %1100 = vmatprep.subr.mxu0 %v918
          %1101 = vmatpush1.msra.mxu0 %v917
          %1102 = vmatprep.subr.mxu0 %v916
          %1103 = vmatpush1.msra.mxu0 %v915
          %1104 = vmatprep.subr.mxu0 %v914
          %1105 = vmatpush1.msra.mxu0 %v913
          %1106 = vmatprep.subr.mxu0 %v912
          %1107 = vmatpush1.msra.mxu0 %v911
          %1108 = vmatprep.subr.mxu0 0.0
          %1109 = vmatpush2.msra.mxu0 0.0
          %1110 = vmatprep.subr.mxu0 0.0
          %1111 = vmatpush2.msra.mxu0 0.0
          %1112 = vmatprep.subr.mxu0 0.0
          %1113 = vmatpush2.msra.mxu0 0.0
          %1114 = vmatprep.subr.mxu0 0.0
          %1115 = vmatpush2.msra.mxu0 0.0
          %1116 = vmatprep.subr.mxu0 0.0
          %1117 = vmatpush2.msra.mxu0 0.0
          %1118 = vmatprep.subr.mxu0 0.0
          %1119 = vmatpush2.msra.mxu0 0.0
          %1120 = vmatprep.subr.mxu0 0.0
          %1121 = vmatpush2.msra.mxu0 0.0
          %1122 = vmatprep.subr.mxu0 0.0
          %1123 = vmatpush2.msra.mxu0 0.0
          %1124 = vmatprep.subr.mxu0 0.0
          %1125 = vmatpush2.msra.mxu0 0.0
          %1126 = vmatprep.subr.mxu0 0.0
          %1127 = vmatpush2.msra.mxu0 0.0
          %1128 = vmatprep.subr.mxu0 0.0
          %1129 = vmatpush2.msra.mxu0 0.0
          %1130 = vmatprep.subr.mxu0 0.0
          %1131 = vmatpush2.msra.mxu0 0.0
          %1132 = vmatprep.subr.mxu0 0.0
          %1133 = vmatpush2.msra.mxu0 0.0
          %1134 = vmatprep.subr.mxu0 0.0
          %1135 = vmatpush2.msra.mxu0 0.0
          %1136 = vmatprep.subr.mxu0 0.0
          %1137 = vmatpush2.msra.mxu0 0.0
          %1138 = vmatprep.subr.mxu0 0.0
          %1139 = vmatpush2.msra.mxu0 0.0
          %1140 = vmatprep.mubr.f32.mxu0 0.0
          %1141 = vmatmul.mubr.f32.gmra.mxu0 %v1074
          %v1142 = vpop.f32.mrf.mxu0
          %v1143 = vadd.f32 0.0, %v1142
          %v1144 = vpop.f32.mrf.mxu0
          %v1145 = vadd.f32 0.0, %v1144
          %1146 = vdwg.mxu0
          %v1147 = vlaneseq
          %v1148 = vshrl.u32 %v1147, 7
          %v1149 = vsub.s32 0, %v1148
          %v1150 = vrot.slane %v909, %v1149
          %v1151 = vadd.f32 %v1143, %v1150
          %vm1152 = vcmask 1043456
          %v1153 = vsel %vm1152, %v1151, 0.0
          %v1154 = vrot.slane %v1153, 4
          %v1155 = vadd.f32 %v1153, %v1154
          %v1156 = vrot.slane %v1155, 2
          %v1157 = vadd.f32 %v1155, %v1156
          %v1158 = vrot.slane %v1157, 1
          %v1159 = vadd.f32 %v1157, %v1158
          %v1160 = vrcp.pop 4.0
          %v1161 = vmul.f32 %v1159, %v1160
          %v1162 = vsub.f32 %v1151, %v1161
          %v1163 = vmul.f32 %v1162, %v1162
          %v1164 = vsel %vm1152, %v1163, 0.0
          %v1165 = vrot.slane %v1164, 4
          %v1166 = vadd.f32 %v1164, %v1165
          %v1167 = vrot.slane %v1166, 2
          %v1168 = vadd.f32 %v1166, %v1167
          %v1169 = vrot.slane %v1168, 1
          %v1170 = vadd.f32 %v1168, %v1169
          %v1171 = vmul.f32 %v1170, %v1160
          %v1172 = vlaneseq
          %v1173 = vshrl.u32 %v1172, 7
          %v1174 = vsub.s32 1, %v1173
          %v1175 = vrot.slane %v909, %v1174
          %v1176 = vmul.f32 %v1175, %v1162
          %v1177 = vadd.f32 %v1171, 1e-05
          %v1178 = vrsqrt.pop %v1177
          %v1179 = vmul.f32 %v1176, %v1178
          %v1180 = vlaneseq
          %v1181 = vshrl.u32 %v1180, 7
          %v1182 = vsub.s32 2, %v1181
          %v1183 = vrot.slane %v909, %v1182
          %v1184 = vadd.f32 %v1179, %v1183
          %v1185 = vlaneseq
          %v1186 = vshrl.u32 %v1185, 7
          %v1187 = vsub.s32 3, %v1186
          %v1188 = vrot.slane %v909, %v1187
          %v1189 = vadd.f32 %v1145, %v1188
          %v1190 = vsel %vm1152, %v1189, 0.0
          %v1191 = vrot.slane %v1190, 4
          %v1192 = vadd.f32 %v1190, %v1191
          %v1193 = vrot.slane %v1192, 2
          %v1194 = vadd.f32 %v1192, %v1193
          %v1195 = vrot.slane %v1194, 1
          %v1196 = vadd.f32 %v1194, %v1195
          %v1197 = vmul.f32 %v1196, %v1160
          %v1198 = vsub.f32 %v1189, %v1197
          %v1199 = vmul.f32 %v1198, %v1198
          %v1200 = vsel %vm1152, %v1199, 0.0
          %v1201 = vrot.slane %v1200, 4
          %v1202 = vadd.f32 %v1200, %v1201
          %v1203 = vrot.slane %v1202, 2
          %v1204 = vadd.f32 %v1202, %v1203
          %v1205 = vrot.slane %v1204, 1
          %v1206 = vadd.f32 %v1204, %v1205
          %v1207 = vmul.f32 %v1206, %v1160
          %v1208 = vlaneseq
          %v1209 = vshrl.u32 %v1208, 7
          %v1210 = vsub.s32 4, %v1209
          %v1211 = vrot.slane %v909, %v1210
          %v1212 = vmul.f32 %v1211, %v1198
          %v1213 = vadd.f32 %v1207, 1e-05
          %v1214 = vrsqrt.pop %v1213
          %v1215 = vmul.f32 %v1212, %v1214
          %v1216 = vlaneseq
          %v1217 = vshrl.u32 %v1216, 7
          %v1218 = vsub.s32 5, %v1217
          %v1219 = vrot.slane %v909, %v1218
          %v1220 = vadd.f32 %v1215, %v1219
          %v1221 = vmax.f32 %v1220, 0.0
          %v1222 = vld [vmem:[%s5] sm:$0xff]
          %v1223 = vld [vmem:[%s5 + $0x8] sm:$0xff]
          %v1224 = vld [vmem:[%s5 + $0x10] sm:$0xff]
          %v1225 = vld [vmem:[%s5 + $0x18] sm:$0xff]
          %v1226 = vld [vmem:[%s5 + $0x20] sm:$0xff]
          %v1227 = vld [vmem:[%s5 + $0x28] sm:$0xff]
          %v1228 = vld [vmem:[%s5 + $0x30] sm:$0xff]
          %v1229 = vld [vmem:[%s5 + $0x38] sm:$0xff]
          %v1230 = vld [vmem:[%s5 + $0x40] sm:$0xff]
          %v1231 = vld [vmem:[%s5 + $0x48] sm:$0xff]
          %v1232 = vld [vmem:[%s5 + $0x50] sm:$0xff]
          %v1233 = vld [vmem:[%s5 + $0x58] sm:$0xff]
          %v1234 = vld [vmem:[%s5 + $0x60] sm:$0xff]
          %v1235 = vld [vmem:[%s5 + $0x68] sm:$0xff]
          %v1236 = vld [vmem:[%s5 + $0x70] sm:$0xff]
          %v1237 = vld [vmem:[%s5 + $0x78] sm:$0xff]
          %v1238 = vlaneseq
          %v1239 = vshrl.u32 %v1238, 7
          %v1240 = vsub.s32 6, %v1239
          %v1241 = vrot.slane %v909, %v1240
          %1242 = vmatprep.subr.mxu0 0.0
          %1243 = vmatpush1.msra.mxu0 %v1237
          %1244 = vmatprep.subr.mxu0 0.0
          %1245 = vmatpush1.msra.mxu0 %v1236
          %1246 = vmatprep.subr.mxu0 0.0
          %1247 = vmatpush1.msra.mxu0 %v1235
          %1248 = vmatprep.subr.mxu0 0.0
          %1249 = vmatpush1.msra.mxu0 %v1234
          %1250 = vmatprep.subr.mxu0 0.0
          %1251 = vmatpush1.msra.mxu0 %v1233
          %1252 = vmatprep.subr.mxu0 0.0
          %1253 = vmatpush1.msra.mxu0 %v1232
          %1254 = vmatprep.subr.mxu0 0.0
          %1255 = vmatpush1.msra.mxu0 %v1231
          %1256 = vmatprep.subr.mxu0 0.0
          %1257 = vmatpush1.msra.mxu0 %v1230
          %1258 = vmatprep.subr.mxu0 0.0
          %1259 = vmatpush1.msra.mxu0 %v1229
          %1260 = vmatprep.subr.mxu0 0.0
          %1261 = vmatpush1.msra.mxu0 %v1228
          %1262 = vmatprep.subr.mxu0 0.0
          %1263 = vmatpush1.msra.mxu0 %v1227
          %1264 = vmatprep.subr.mxu0 0.0
          %1265 = vmatpush1.msra.mxu0 %v1226
          %1266 = vmatprep.subr.mxu0 0.0
          %1267 = vmatpush1.msra.mxu0 %v1225
          %1268 = vmatprep.subr.mxu0 0.0
          %1269 = vmatpush1.msra.mxu0 %v1224
          %1270 = vmatprep.subr.mxu0 0.0
          %1271 = vmatpush1.msra.mxu0 %v1223
          %1272 = vmatprep.subr.mxu0 0.0
          %1273 = vmatpush1.msra.mxu0 %v1222
          %1274 = vmatprep.subr.mxu0 0.0
          %1275 = vmatpush2.msra.mxu0 0.0
          %1276 = vmatprep.subr.mxu0 0.0
          %1277 = vmatpush2.msra.mxu0 0.0
          %1278 = vmatprep.subr.mxu0 0.0
          %1279 = vmatpush2.msra.mxu0 0.0
          %1280 = vmatprep.subr.mxu0 0.0
          %1281 = vmatpush2.msra.mxu0 0.0
          %1282 = vmatprep.subr.mxu0 0.0
          %1283 = vmatpush2.msra.mxu0 0.0
          %1284 = vmatprep.subr.mxu0 0.0
          %1285 = vmatpush2.msra.mxu0 0.0
          %1286 = vmatprep.subr.mxu0 0.0
          %1287 = vmatpush2.msra.mxu0 0.0
          %1288 = vmatprep.subr.mxu0 0.0
          %1289 = vmatpush2.msra.mxu0 0.0
          %1290 = vmatprep.subr.mxu0 0.0
          %1291 = vmatpush2.msra.mxu0 0.0
          %1292 = vmatprep.subr.mxu0 0.0
          %1293 = vmatpush2.msra.mxu0 0.0
          %1294 = vmatprep.subr.mxu0 0.0
          %1295 = vmatpush2.msra.mxu0 0.0
          %1296 = vmatprep.subr.mxu0 0.0
          %1297 = vmatpush2.msra.mxu0 0.0
          %1298 = vmatprep.subr.mxu0 0.0
          %1299 = vmatpush2.msra.mxu0 0.0
          %1300 = vmatprep.subr.mxu0 0.0
          %1301 = vmatpush2.msra.mxu0 0.0
          %1302 = vmatprep.subr.mxu0 0.0
          %1303 = vmatpush2.msra.mxu0 0.0
          %1304 = vmatprep.subr.mxu0 0.0
          %1305 = vmatpush2.msra.mxu0 0.0
          %1306 = vmatprep.mubr.f32.mxu0 0.0
          %1307 = vmatmul.mubr.f32.gmra.mxu0 %v1221
          %v1308 = vpop.f32.mrf.mxu0
          %v1309 = vadd.f32 %v1241, %v1308
          %v1310 = vpop.f32.mrf.mxu0
          %1311 = vdwg.mxu0
          %v1312 = vsel %vm1152, %v1309, 0.0
          %v1313 = vrot.slane %v1312, 4
          %v1314 = vadd.f32 %v1312, %v1313
          %v1315 = vrot.slane %v1314, 2
          %v1316 = vadd.f32 %v1314, %v1315
          %v1317 = vrot.slane %v1316, 1
          %v1318 = vadd.f32 %v1316, %v1317
          %v1319 = vmul.f32 %v1318, %v1160
          %v1320 = vsub.f32 %v1309, %v1319
          %v1321 = vmul.f32 %v1320, %v1320
          %v1322 = vsel %vm1152, %v1321, 0.0
          %v1323 = vrot.slane %v1322, 4
          %v1324 = vadd.f32 %v1322, %v1323
          %v1325 = vrot.slane %v1324, 2
          %v1326 = vadd.f32 %v1324, %v1325
          %v1327 = vrot.slane %v1326, 1
          %v1328 = vadd.f32 %v1326, %v1327
          %v1329 = vmul.f32 %v1328, %v1160
          %v1330 = vlaneseq
          %v1331 = vshrl.u32 %v1330, 7
          %v1332 = vsub.s32 7, %v1331
          %v1333 = vrot.slane %v909, %v1332
          %v1334 = vmul.f32 %v1333, %v1320
          %v1335 = vadd.f32 %v1329, 1e-05
          %v1336 = vrsqrt.pop %v1335
          %v1337 = vmul.f32 %v1334, %v1336
          %v1338 = vlaneseq
          %v1339 = vshrl.u32 %v1338, 7
          %v1340 = vsub.s32 0, %v1339
          %v1341 = vrot.slane %v910, %v1340
          %v1342 = vadd.f32 %v1337, %v1341
          %v1343 = vmul.f32 %v1342, 0.5
          %v1344 = vmul.f32 %v1343, 1.442695
          %v1345 = vpow.pop %v1344
          %v1346 = vld [vmem:[%s7] sm:$0xf]
          %v1347 = vld [vmem:[%s7 + $0x4] sm:$0xf]
          %v1348 = vld [vmem:[%s7 + $0x8] sm:$0xf]
          %v1349 = vld [vmem:[%s7 + $0xc] sm:$0xf]
          %v1352 = vunpack.c.l.s4 1966171168
          %v1353 = vunpack.c.0.s8 %v1352
          %v1354 = vlaneseq
          %v1355 = vshrl.u32 %v1354, 7
          %v1356 = vsub.s32 %v1353, %v1355
          %v1357 = vrot.slane %v1184, %v1356
          %v1358 = vcombine.high %v1357, %v1357
          %v1360 = vunpack.c.l.s4 1966171168
          %v1361 = vunpack.c.0.s8 %v1360
          %v1362 = vlaneseq
          %v1363 = vshrl.u32 %v1362, 7
          %v1364 = vsub.s32 %v1361, %v1363
          %v1365 = vrot.slane %v1357, %v1364
          %v1367 = vunpack.c.l.s4 1966171168
          %v1368 = vunpack.c.0.s8 %v1367
          %v1369 = vlaneseq
          %v1370 = vshrl.u32 %v1369, 7
          %v1371 = vsub.s32 %v1368, %v1370
          %v1372 = vrot.slane %v1358, %v1371
          %v1373 = vcombine.high %v1365, %v1365
          %v1374 = vcombine.high %v1372, %v1372
          %v1377 = vunpack.c.l.s4 1966171168
          %v1378 = vunpack.c.0.s8 %v1377
          %v1379 = vlaneseq
          %v1380 = vshrl.u32 %v1379, 7
          %v1381 = vsub.s32 %v1378, %v1380
          %v1382 = vrot.slane %v1345, %v1381
          %v1383 = vcombine.high %v1382, %v1382
          %v1385 = vunpack.c.l.s4 1966171168
          %v1386 = vunpack.c.0.s8 %v1385
          %v1387 = vlaneseq
          %v1388 = vshrl.u32 %v1387, 7
          %v1389 = vsub.s32 %v1386, %v1388
          %v1390 = vrot.slane %v1382, %v1389
          %v1392 = vunpack.c.l.s4 1966171168
          %v1393 = vunpack.c.0.s8 %v1392
          %v1394 = vlaneseq
          %v1395 = vshrl.u32 %v1394, 7
          %v1396 = vsub.s32 %v1393, %v1395
          %v1397 = vrot.slane %v1383, %v1396
          %v1398 = vcombine.high %v1390, %v1390
          %v1399 = vcombine.high %v1397, %v1397
          %v1400 = vlaneseq
          %v1401 = vshrl.u32 %v1400, 7
          %v1402 = vsub.s32 0, %v1401
          %v1403 = vrot.slane %v1390, %v1402
          %v1404 = vlaneseq
          %v1405 = vshrl.u32 %v1404, 7
          %v1406 = vsub.s32 0, %v1405
          %v1407 = vrot.slane %v1397, %v1406
          %v1408 = vlaneseq
          %v1409 = vshrl.u32 %v1408, 7
          %v1410 = vsub.s32 0, %v1409
          %v1411 = vrot.slane %v1398, %v1410
          %v1412 = vlaneseq
          %v1413 = vshrl.u32 %v1412, 7
          %v1414 = vsub.s32 0, %v1413
          %v1415 = vrot.slane %v1399, %v1414
          %v1420 = vmul.f32 %v1346, %v1403
          %v1421 = vmul.f32 %v1347, %v1407
          %v1422 = vmul.f32 %v1348, %v1411
          %v1423 = vmul.f32 %v1349, %v1415
          %v1424 = vlaneseq
          %v1425 = vshrl.u32 %v1424, 7
          %v1426 = vsub.s32 0, %v1425
          %v1427 = vrot.slane %v1365, %v1426
          %v1428 = vlaneseq
          %v1429 = vshrl.u32 %v1428, 7
          %v1430 = vsub.s32 0, %v1429
          %v1431 = vrot.slane %v1372, %v1430
          %v1432 = vlaneseq
          %v1433 = vshrl.u32 %v1432, 7
          %v1434 = vsub.s32 0, %v1433
          %v1435 = vrot.slane %v1373, %v1434
          %v1436 = vlaneseq
          %v1437 = vshrl.u32 %v1436, 7
          %v1438 = vsub.s32 0, %v1437
          %v1439 = vrot.slane %v1374, %v1438
          %v1444 = vadd.f32 %v1427, %v1420
          %v1445 = vadd.f32 %v1431, %v1421
          %v1446 = vadd.f32 %v1435, %v1422
          %v1447 = vadd.f32 %v1439, %v1423
          %v1448 = vmul.f32 %v1444, %v1444
          %v1449 = vmul.f32 %v1445, %v1445
          %v1450 = vmul.f32 %v1446, %v1446
          %v1451 = vmul.f32 %v1447, %v1447
          %v1452 = vsel %vm1152, %v1448, 0.0
          %1453 = vadd.xlane.f32.xlu0 %v1452
          %v1454 = vpop.xlane.xlu0 %1453
          %v1455 = vsel %vm1152, %v1449, 0.0
          %1456 = vadd.xlane.f32.xlu0 %v1455
          %v1457 = vpop.xlane.xlu0 %1456
          %v1458 = vsel %vm1152, %v1450, 0.0
          %1459 = vadd.xlane.f32.xlu0 %v1458
          %v1460 = vpop.xlane.xlu0 %1459
          %v1461 = vsel %vm1152, %v1451, 0.0
          %1462 = vadd.xlane.f32.xlu0 %v1461
          %v1463 = vpop.xlane.xlu0 %1462
          %v1464 = vadd.f32 %v1454, 1e-12
          %v1465 = vadd.f32 %v1457, 1e-12
          %v1466 = vadd.f32 %v1460, 1e-12
          %v1467 = vadd.f32 %v1463, 1e-12
          %v1468 = vrsqrt.pop %v1464
          %v1469 = vrsqrt.pop %v1465
          %v1470 = vrsqrt.pop %v1466
          %v1471 = vrsqrt.pop %v1467
          %v1472 = vmul.f32 %v1444, %v1468
          %v1473 = vmul.f32 %v1445, %v1469
          %v1474 = vmul.f32 %v1446, %v1470
          %v1475 = vmul.f32 %v1447, %v1471
          %1476 = vst [vmem:[#allocation4] sm:$0xf] %v1184
          %1477 = vst [vmem:[#allocation6] sm:$0xf] %v1345
          %1478 = vst [vmem:[#allocation8] sm:$0xf] %v1472
          %1479 = vst [vmem:[#allocation8 + $0x4] sm:$0xf] %v1473
          %1480 = vst [vmem:[#allocation8 + $0x8] sm:$0xf] %v1474
          %1481 = vst [vmem:[#allocation8 + $0xc] sm:$0xf] %v1475
        $region101: #{uncertainty_module_forward.1} parent=88 // pred_fallthru
          _
        // Predicated region
        $region102: #{uncertainty_module_forward.1} parent=88 // pred_check
          %p1482 = pneg %p210
        $region103: #{uncertainty_module_forward.1} parent=88 // pred_check_branch
          %1484 = sbr.rel (%p1482) target = $region105
        $region104: #{uncertainty_module_forward.1} parent=88 // pred_region
          %s1486 = ssub.s32 64, 64
          %1487 = vsyncadd [#allocation5], %s1486
          %s1489 = sshll.u32 [#allocation4], 4
          %s1490 = int_to_ptr.vmem [resolvable:$true] %s1489
          %1492 = dma.vmem_to_hbm [thread:$0]  %s1490, 64, %s8, [#allocation5]
        $region105: #{uncertainty_module_forward.1} parent=88 // pred_fallthru
          _
        // Predicated region
        $region106: #{uncertainty_module_forward.1} parent=88 // pred_check
          %p1493 = pneg %p231
        $region107: #{uncertainty_module_forward.1} parent=88 // pred_check_branch
          %1495 = sbr.rel (%p1493) target = $region109
        $region108: #{uncertainty_module_forward.1} parent=88 // pred_region
          %s1497 = ssub.s32 64, 64
          %1498 = vsyncadd [#allocation7], %s1497
          %s1500 = sshll.u32 [#allocation6], 4
          %s1501 = int_to_ptr.vmem [resolvable:$true] %s1500
          %1503 = dma.vmem_to_hbm [thread:$0]  %s1501, 64, %s9, [#allocation7]
        $region109: #{uncertainty_module_forward.1} parent=88 // pred_fallthru
          _
        // Predicated region
        $region110: #{uncertainty_module_forward.1} parent=88 // pred_check
          %p1504 = pneg %p252
        $region111: #{uncertainty_module_forward.1} parent=88 // pred_check_branch
          %1506 = sbr.rel (%p1504) target = $region113
        $region112: #{uncertainty_module_forward.1} parent=88 // pred_region
          %s1508 = ssub.s32 256, 256
          %1509 = vsyncadd [#allocation7], %s1508
          %s1510 = sshll.u32 [#allocation8], 4
          %s1511 = int_to_ptr.vmem [resolvable:$true] %s1510
          %1516 = dma.vmem_to_hbm [thread:$0]  %s1511, 256, %s10, [#allocation7], 64, 64, 4
        $region113: #{uncertainty_module_forward.1} parent=88 // pred_fallthru
          _
        // Predicated region
        $region114: #{uncertainty_module_forward.1} parent=88 // pred_check
          %p1517 = pneg %p210
        $region115: #{uncertainty_module_forward.1} parent=88 // pred_check_branch
          %1519 = sbr.rel (%p1517) target = $region117
        $region116: #{uncertainty_module_forward.1} parent=88 // pred_region
          %1520 = dma.done [#allocation5], 64
        $region117: #{uncertainty_module_forward.1} parent=88 // pred_fallthru
          _
        // Predicated region
        $region118: #{uncertainty_module_forward.1} parent=88 // pred_check
          %p1521 = pneg %p231
        $region119: #{uncertainty_module_forward.1} parent=88 // pred_check_branch
          %1523 = sbr.rel (%p1521) target = $region121
        $region120: #{uncertainty_module_forward.1} parent=88 // pred_region
          %1524 = dma.done [#allocation7], 64
        $region121: #{uncertainty_module_forward.1} parent=88 // pred_fallthru
          _
        // Predicated region
        $region122: #{uncertainty_module_forward.1} parent=88 // pred_check
          %p1525 = pneg %p252
        $region123: #{uncertainty_module_forward.1} parent=88 // pred_check_branch
          %1527 = sbr.rel (%p1525) target = $region125
        $region124: #{uncertainty_module_forward.1} parent=88 // pred_region
          %1528 = dma.done [#allocation7], 256
        $region125: #{uncertainty_module_forward.1} parent=88 // pred_fallthru
          _
      $region89: #{uncertainty_module_forward.1} parent=5 // pred_fallthru
        _
      %p1529 = scmp.le.s32.totalorder 2, %s19
      // Predicated region
      $region126: #{uncertainty_module_forward.1} parent=5 // pred_check
        %p1530 = pneg %p1529
      $region127: #{uncertainty_module_forward.1} parent=5 // pred_check_branch
        %1532 = sbr.rel (%p1530) target = $region129
      $region128: #{uncertainty_module_forward.1} parent=5 // pred_region
        %s1533 = ssub.s32 %s19, 2
      $region129: #{uncertainty_module_forward.1} parent=5 // pred_fallthru
        _
    $region6: #{uncertainty_module_forward.1} parent=1 // loop_footer
      %s23 = sadd.s32 1, %s19
    $region7: #{uncertainty_module_forward.1} parent=1 // loop_footer_branch
      %18 = sbr.rel target = $region3
    $region8: #{uncertainty_module_forward.1} parent=1 // loop_exit
      _
    %1534 = vsyncpa [#allocation5], 1
    %s1535 = scalar_lea.sflag [#allocation5], 1
    %1536 = vsyncpa %s1535, 1
    %1537 = vsyncpa [#allocation7], 1

</llo_original>
